<compile_context>
chip_gen: v7x
topology: tpu7x:2x2x1
jax: 0.10.0
libtpu: 0.0.40
codegen_flags: <defaults>
</compile_context>

<pallas_src>
import itertools
import math
from functools import partial

import jax
import jax.numpy as jnp
from jax.experimental import pallas as pl
from jax.experimental.pallas import tpu as pltpu

# ----------------------------- model config ---------------------------------
KMER = 3
HIDDEN = 32          # hidden_size
NUM_HEADS = 2        # num_attention_heads
NUM_LAYERS = 2       # num_hidden_layers
INTERMEDIATE = 64    # intermediate_size
MAX_POS = 32
TYPE_VOCAB = 2
LN_EPS = 1e-12


# ----------------------------- kernel helpers --------------------------------
def _layer_norm(x, g, b, eps=LN_EPS):
    mu = jnp.mean(x, axis=-1, keepdims=True)
    var = jnp.mean((x - mu) ** 2, axis=-1, keepdims=True)
    return (x - mu) * jax.lax.rsqrt(var + eps) * g + b


# ----------------------------- fused BERT kernel ------------------------------
def bert_kernel(x_ref, mask_ref, misc_ref,
                wqkv_ref, wo_ref, w1_ref, w2_ref, small_ref, pool_w_ref,
                out_ref, *, batch, seq, num_heads, pooling):
    B, S, NH = batch, seq, num_heads
    H = x_ref.shape[-1]
    I = w1_ref.shape[-1]
    DH = H // NH
    L = wqkv_ref.shape[0]
    scale = 1.0 / math.sqrt(DH)

    x = x_ref[...].astype(jnp.float32)               # [B*S, H]
    mask = mask_ref[...].astype(jnp.float32)         # [B, S] additive mask
    misc = misc_ref[...]                             # [3, H]: emb_ln_g, emb_ln_b, pool_b

    # Embedding LayerNorm.
    hidden = _layer_norm(x, misc[0:1, :], misc[1:2, :])          # [B*S, H] f32

    first_hidden = hidden
    for l in range(L):                                # static layer loop, weights stay in VMEM
        wqkv = wqkv_ref[l]    # [H, 3H] bf16   (q | k | v columns, head-major within each)
        wo   = wo_ref[l]      # [H, H]  bf16
        w1   = w1_ref[l]      # [H, I]  bf16
        w2   = w2_ref[l]      # [I, H]  bf16
        sm   = small_ref[l]   # [8, max(3H, I)] f32 packed small params
        bqkv = sm[0:1, :3 * H]
        b1   = sm[1:2, :I]
        bo   = sm[2:3, :H]
        b2   = sm[3:4, :H]
        ln1_g, ln1_b = sm[4:5, :H], sm[5:6, :H]
        ln2_g, ln2_b = sm[6:7, :H], sm[7:8, :H]

        h_bf = hidden.astype(jnp.bfloat16)
        # One fused QKV projection for all B*S rows: [B*S, H] x [H, 3H].
        qkv = jnp.dot(h_bf, wqkv, preferred_element_type=jnp.float32) + bqkv   # [B*S, 3H]
        q = qkv[:, 0:H]
        k = qkv[:, H:2 * H]
        v = qkv[:, 2 * H:3 * H]

        # Scores for every (batch, head) stacked along sublanes -> one batched softmax.
        s_list = []
        for b in range(B):                            # static batch loop
            mb = mask[b:b + 1, :]                     # [1, S]
            for hd in range(NH):                      # static head loop
                qh = q[b * S:(b + 1) * S, hd * DH:(hd + 1) * DH].astype(jnp.bfloat16)
                kh = k[b * S:(b + 1) * S, hd * DH:(hd + 1) * DH].astype(jnp.bfloat16)
                s = jax.lax.dot_general(qh, kh, (((1,), (1,)), ((), ())),
                                        preferred_element_type=jnp.float32)    # [S, S]
                s_list.append(s * scale + mb)
        s_all = jnp.concatenate(s_list, axis=0)       # [B*NH*S, S]

        m = jnp.max(s_all, axis=-1, keepdims=True)
        e = jnp.exp(s_all - m)                        # f32 softmax (v5e-safe)
        denom = jnp.sum(e, axis=-1, keepdims=True)
        p_all = e * pl.reciprocal(denom, approx=True)

        # Per-(batch, head) PV, reassembled to [B*S, H] (lane concat per head, sublane per batch).
        ctx_rows = []
        for b in range(B):
            heads = []
            for hd in range(NH):
                r = (b * NH + hd) * S
                p_bh = p_all[r:r + S, :].astype(jnp.bfloat16)
                v_bh = v[b * S:(b + 1) * S, hd * DH:(hd + 1) * DH].astype(jnp.bfloat16)
                heads.append(jnp.dot(p_bh, v_bh, preferred_element_type=jnp.float32))
            ctx_rows.append(jnp.concatenate(heads, axis=1))      # [S, H]
        ctx = jnp.concatenate(ctx_rows, axis=0)                  # [B*S, H]

        # Single output projection.
        attn_out = jnp.dot(ctx.astype(jnp.bfloat16), wo,
                           preferred_element_type=jnp.float32) + bo

        h1 = _layer_norm(attn_out + hidden, ln1_g, ln1_b)

        # TODO(synk): HF BERT uses exact erf GELU; tanh-approx GELU kept for robust TPU lowering.
        ff = jax.nn.gelu(
            jnp.dot(h1.astype(jnp.bfloat16), w1, preferred_element_type=jnp.float32) + b1,
            approximate=True)
        ff = jnp.dot(ff.astype(jnp.bfloat16), w2, preferred_element_type=jnp.float32) + b2
        hidden = _layer_norm(ff + h1, ln2_g, ln2_b)
        if l == 0:
            first_hidden = hidden     # == HF hidden_states[1] (first encoder layer output)

    last = hidden                                               # [B*S, H]
    last3 = last.reshape(B, S, H)

    if pooling == "pooler":
        cls = last3[:, 0, :]                                    # [B, H]
        z = jnp.dot(cls.astype(jnp.bfloat16), pool_w_ref[...],
                    preferred_element_type=jnp.float32) + misc[2:3, :]
        out = jnp.tanh(z)
    elif pooling == "cls":
        out = last3[:, 0, :]
    elif pooling == "last-avg":
        out = jnp.mean(last3, axis=1)
    elif pooling == "first-last-avg":
        favg = jnp.mean(first_hidden.reshape(B, S, H), axis=1)
        lavg = jnp.mean(last3, axis=1)
        out = (favg + lavg) * 0.5
    else:
        out = last                                              # full last hidden state

    out_ref[...] = out.astype(out_ref.dtype)


# ----------------------------- parameters -------------------------------------
def init_params(key, vocab_size):
    keys = iter(jax.random.split(key, 8 + 8 * NUM_LAYERS))

    def dense(k, fi, fo):
        return jax.random.normal(k, (fi, fo), jnp.float32) * 0.02

    params = {
        "word_emb": jax.random.normal(next(keys), (vocab_size, HIDDEN), jnp.float32) * 0.02,
        "pos_emb": jax.random.normal(next(keys), (MAX_POS, HIDDEN), jnp.float32) * 0.02,
        "type_emb": jax.random.normal(next(keys), (TYPE_VOCAB, HIDDEN), jnp.float32) * 0.02,
        "emb_ln_g": jnp.ones((1, HIDDEN), jnp.float32),
        "emb_ln_b": jnp.zeros((1, HIDDEN), jnp.float32),
        "layers": [],
    }
    for _ in range(NUM_LAYERS):
        lw = {
            "wq": dense(next(keys), HIDDEN, HIDDEN), "bq": jnp.zeros((1, HIDDEN), jnp.float32),
            "wk": dense(next(keys), HIDDEN, HIDDEN), "bk": jnp.zeros((1, HIDDEN), jnp.float32),
            "wv": dense(next(keys), HIDDEN, HIDDEN), "bv": jnp.zeros((1, HIDDEN), jnp.float32),
            "wo": dense(next(keys), HIDDEN, HIDDEN), "bo": jnp.zeros((1, HIDDEN), jnp.float32),
            "ln1_g": jnp.ones((1, HIDDEN), jnp.float32), "ln1_b": jnp.zeros((1, HIDDEN), jnp.float32),
            "w1": dense(next(keys), HIDDEN, INTERMEDIATE), "b1": jnp.zeros((1, INTERMEDIATE), jnp.float32),
            "w2": dense(next(keys), INTERMEDIATE, HIDDEN), "b2": jnp.zeros((1, HIDDEN), jnp.float32),
            "ln2_g": jnp.ones((1, HIDDEN), jnp.float32), "ln2_b": jnp.zeros((1, HIDDEN), jnp.float32),
        }
        params["layers"].append(lw)
    params["pool_w"] = dense(next(keys), HIDDEN, HIDDEN)
    params["pool_b"] = jnp.zeros((1, HIDDEN), jnp.float32)
    return params


def pack_params(p):
    """Stack per-layer weights into [L, ...] arrays, fuse Q/K/V along lanes, cast matmul
    weights to bf16, and pack all small f32 params (biases + LN) into one array per layer."""
    H, I = HIDDEN, INTERMEDIATE
    W = max(3 * H, I)

    def pad_row(a):  # [1, w] -> [1, W]
        return jnp.pad(a, ((0, 0), (0, W - a.shape[1])))

    wqkv, wo, w1, w2, small = [], [], [], [], []
    for lw in p["layers"]:
        wqkv.append(jnp.concatenate([lw["wq"], lw["wk"], lw["wv"]], axis=1))   # [H, 3H]
        wo.append(lw["wo"])
        w1.append(lw["w1"])
        w2.append(lw["w2"])
        bqkv = jnp.concatenate([lw["bq"], lw["bk"], lw["bv"]], axis=1)         # [1, 3H]
        small.append(jnp.concatenate([
            pad_row(bqkv), pad_row(lw["b1"]), pad_row(lw["bo"]), pad_row(lw["b2"]),
            pad_row(lw["ln1_g"]), pad_row(lw["ln1_b"]),
            pad_row(lw["ln2_g"]), pad_row(lw["ln2_b"]),
        ], axis=0))                                                             # [8, W]

    st = lambda xs: jnp.stack(xs, axis=0)
    return {
        "misc": jnp.concatenate([p["emb_ln_g"], p["emb_ln_b"], p["pool_b"]], axis=0),  # [3, H]
        "wqkv": st(wqkv).astype(jnp.bfloat16),   # [L, H, 3H]
        "wo": st(wo).astype(jnp.bfloat16),       # [L, H, H]
        "w1": st(w1).astype(jnp.bfloat16),       # [L, H, I]
        "w2": st(w2).astype(jnp.bfloat16),       # [L, I, H]
        "small": st(small),                      # [L, 8, W] f32
        "pool_w": p["pool_w"].astype(jnp.bfloat16),  # [H, H]
    }


# ----------------------------- tokenizer (glue) --------------------------------
def build_kmer_vocab(k):
    specials = ["[PAD]", "[UNK]", "[CLS]", "[SEP]", "[MASK]"]
    kmers = ["".join(p) for p in itertools.product("ACGT", repeat=k)]
    return {tok: i for i, tok in enumerate(specials + kmers)}


def tokenize(seqs, vocab, k):
    cls_id, sep_id, unk_id = vocab["[CLS]"], vocab["[SEP]"], vocab["[UNK]"]
    ids = []
    for s in seqs:
        kmer_toks = [s[x:x + k] for x in range(len(s) + 1 - k)]
        ids.append([cls_id] + [vocab.get(t, unk_id) for t in kmer_toks] + [sep_id])
    input_ids = jnp.asarray(ids, dtype=jnp.int32)
    token_type_ids = jnp.zeros_like(input_ids)
    attention_mask = jnp.ones_like(input_ids)
    return input_ids, token_type_ids, attention_mask


# ----------------------------- full forward ------------------------------------
@partial(jax.jit, static_argnames=("pooling",))
def bert_forward(embed, packed, input_ids, token_type_ids, attention_mask, pooling="pooler"):
    B, S = input_ids.shape
    H = HIDDEN
    pos = jnp.arange(S)
    emb = (embed["word_emb"][input_ids]
           + embed["pos_emb"][pos][None, :, :]
           + embed["type_emb"][token_type_ids])                         # [B, S, H]
    emb_flat = emb.reshape(B * S, H)
    # HF-style additive attention mask: 0 where attended, -10000 where masked.
    mask_add = (1.0 - attention_mask.astype(jnp.float32)) * -10000.0    # [B, S]

    kernel = partial(bert_kernel, batch=B, seq=S, num_heads=NUM_HEADS, pooling=pooling)
    args = (emb_flat, mask_add, packed["misc"],
            packed["wqkv"], packed["wo"], packed["w1"], packed["w2"],
            packed["small"], packed["pool_w"])

    reduced = pooling in ("pooler", "cls", "last-avg", "first-last-avg")
    out_shape = (jax.ShapeDtypeStruct((B, H), jnp.float32) if reduced
                 else jax.ShapeDtypeStruct((B * S, H), jnp.float32))

    vmem = lambda: pl.BlockSpec(memory_space=pltpu.MemorySpace.VMEM)
    out = pl.pallas_call(
        kernel,
        out_shape=out_shape,
        in_specs=[vmem() for _ in args],
        out_specs=vmem(),
    )(*args)

    if reduced:
        return out
    return out.reshape(B, S, H)


class BERT:
    """Mirror of the PyTorch wrapper: forward(seqs) -> pooled representation."""

    def __init__(self, kmer=KMER, pooling="pooler"):
        self.kmer = kmer
        self.pooling = pooling
        self.vocab = build_kmer_vocab(kmer)
        raw = init_params(jax.random.PRNGKey(0), vocab_size=len(self.vocab))
        self.embed = {k: raw[k] for k in ("word_emb", "pos_emb", "type_emb")}
        self.packed = pack_params(raw)

    def forward(self, seqs):
        seqs = list(seqs)
        input_ids, token_type_ids, attention_mask = tokenize(seqs, self.vocab, self.kmer)
        return bert_forward(self.embed, self.packed, input_ids, token_type_ids,
                            attention_mask, pooling=self.pooling)


# ----------------------------- main ---------------------------------------------
if __name__ == "__main__":
    # Two DNA sequences of length 8, kmer=3 -> 6 k-mers -> 8 tokens ([CLS]..[SEP]).
    seqs = ["ACGTACGT", "TTGGCCAA"]
    model = BERT(kmer=KMER, pooling="pooler")
    out = model.forward(seqs)           # [B=2, HIDDEN=32] pooler_output
    jax.block_until_ready(out)
    assert out.shape == (2, HIDDEN)
    print("KERNEL_OK")
</pallas_src>

<mosaic_0001>
module attributes {stable_mosaic.version = 11 : i64} {
  func.func @bert_kernel(%arg0: memref<16x32xf32, #tpu.memory_space<vmem>>, %arg1: memref<2x8xf32, #tpu.memory_space<vmem>>, %arg2: memref<3x32xf32, #tpu.memory_space<vmem>>, %arg3: memref<2x32x96xbf16, #tpu.memory_space<vmem>>, %arg4: memref<2x32x32xbf16, #tpu.memory_space<vmem>>, %arg5: memref<2x32x64xbf16, #tpu.memory_space<vmem>>, %arg6: memref<2x64x32xbf16, #tpu.memory_space<vmem>>, %arg7: memref<2x8x96xf32, #tpu.memory_space<vmem>>, %arg8: memref<32x32xbf16, #tpu.memory_space<vmem>>, %arg9: memref<2x32xf32, #tpu.memory_space<vmem>>) attributes {dimension_semantics = [], scalar_prefetch = 0 : i64, scratch_operands = 0 : i64, tpu.core_type = #tpu.core_type<tc>} {
    %c0 = arith.constant 0 : index
    %c0_0 = arith.constant 0 : index
    %0 = vector.load %arg0[%c0, %c0_0] : memref<16x32xf32, #tpu.memory_space<vmem>>, vector<16x32xf32>
    %c0_1 = arith.constant 0 : index
    %c0_2 = arith.constant 0 : index
    %1 = vector.load %arg1[%c0_1, %c0_2] : memref<2x8xf32, #tpu.memory_space<vmem>>, vector<2x8xf32>
    %c0_3 = arith.constant 0 : index
    %c0_4 = arith.constant 0 : index
    %2 = vector.load %arg2[%c0_3, %c0_4] : memref<3x32xf32, #tpu.memory_space<vmem>>, vector<3x32xf32>
    %3 = vector.extract_strided_slice %2 {offsets = [0, 0], sizes = [1, 32], strides = [1, 1]} : vector<3x32xf32> to vector<1x32xf32>
    %4 = vector.extract_strided_slice %2 {offsets = [1, 0], sizes = [1, 32], strides = [1, 1]} : vector<3x32xf32> to vector<1x32xf32>
    %cst = arith.constant dense<0.000000e+00> : vector<16xf32>
    %5 = vector.multi_reduction <add>, %0, %cst [1] : vector<16x32xf32> to vector<16xf32>
    %6 = vector.shape_cast %5 : vector<16xf32> to vector<16x1xf32>
    %cst_5 = arith.constant 3.200000e+01 : f32
    %7 = vector.broadcast %cst_5 : f32 to vector<16x1xf32>
    %8 = arith.divf %6, %7 : vector<16x1xf32>
    %9 = vector.broadcast %8 : vector<16x1xf32> to vector<16x32xf32>
    %10 = arith.subf %0, %9 : vector<16x32xf32>
    %11 = arith.mulf %10, %10 : vector<16x32xf32>
    %cst_6 = arith.constant dense<0.000000e+00> : vector<16xf32>
    %12 = vector.multi_reduction <add>, %11, %cst_6 [1] : vector<16x32xf32> to vector<16xf32>
    %13 = vector.shape_cast %12 : vector<16xf32> to vector<16x1xf32>
    %cst_7 = arith.constant 3.200000e+01 : f32
    %14 = vector.broadcast %cst_7 : f32 to vector<16x1xf32>
    %15 = arith.divf %13, %14 : vector<16x1xf32>
    %16 = vector.broadcast %8 : vector<16x1xf32> to vector<16x32xf32>
    %17 = arith.subf %0, %16 : vector<16x32xf32>
    %cst_8 = arith.constant 9.99999996E-13 : f32
    %18 = vector.broadcast %cst_8 : f32 to vector<16x1xf32>
    %19 = arith.addf %15, %18 : vector<16x1xf32>
    %20 = math.rsqrt %19 : vector<16x1xf32>
    %21 = vector.broadcast %20 : vector<16x1xf32> to vector<16x32xf32>
    %22 = arith.mulf %17, %21 : vector<16x32xf32>
    %23 = vector.broadcast %3 : vector<1x32xf32> to vector<16x32xf32>
    %24 = arith.mulf %22, %23 : vector<16x32xf32>
    %25 = vector.broadcast %4 : vector<1x32xf32> to vector<16x32xf32>
    %26 = arith.addf %24, %25 : vector<16x32xf32>
    %c0_9 = arith.constant 0 : index
    %c0_10 = arith.constant 0 : index
    %c0_11 = arith.constant 0 : index
    %27 = vector.load %arg3[%c0_9, %c0_10, %c0_11] : memref<2x32x96xbf16, #tpu.memory_space<vmem>>, vector<1x32x96xbf16>
    %28 = vector.shape_cast %27 : vector<1x32x96xbf16> to vector<32x96xbf16>
    %c0_12 = arith.constant 0 : index
    %c0_13 = arith.constant 0 : index
    %c0_14 = arith.constant 0 : index
    %29 = vector.load %arg4[%c0_12, %c0_13, %c0_14] : memref<2x32x32xbf16, #tpu.memory_space<vmem>>, vector<1x32x32xbf16>
    %30 = vector.shape_cast %29 : vector<1x32x32xbf16> to vector<32x32xbf16>
    %c0_15 = arith.constant 0 : index
    %c0_16 = arith.constant 0 : index
    %c0_17 = arith.constant 0 : index
    %31 = vector.load %arg5[%c0_15, %c0_16, %c0_17] : memref<2x32x64xbf16, #tpu.memory_space<vmem>>, vector<1x32x64xbf16>
    %32 = vector.shape_cast %31 : vector<1x32x64xbf16> to vector<32x64xbf16>
    %c0_18 = arith.constant 0 : index
    %c0_19 = arith.constant 0 : index
    %c0_20 = arith.constant 0 : index
    %33 = vector.load %arg6[%c0_18, %c0_19, %c0_20] : memref<2x64x32xbf16, #tpu.memory_space<vmem>>, vector<1x64x32xbf16>
    %34 = vector.shape_cast %33 : vector<1x64x32xbf16> to vector<64x32xbf16>
    %c0_21 = arith.constant 0 : index
    %c0_22 = arith.constant 0 : index
    %c0_23 = arith.constant 0 : index
    %35 = vector.load %arg7[%c0_21, %c0_22, %c0_23] : memref<2x8x96xf32, #tpu.memory_space<vmem>>, vector<1x8x96xf32>
    %36 = vector.shape_cast %35 : vector<1x8x96xf32> to vector<8x96xf32>
    %37 = vector.extract_strided_slice %36 {offsets = [0, 0], sizes = [1, 96], strides = [1, 1]} : vector<8x96xf32> to vector<1x96xf32>
    %38 = vector.extract_strided_slice %36 {offsets = [1, 0], sizes = [1, 64], strides = [1, 1]} : vector<8x96xf32> to vector<1x64xf32>
    %39 = vector.extract_strided_slice %36 {offsets = [2, 0], sizes = [1, 32], strides = [1, 1]} : vector<8x96xf32> to vector<1x32xf32>
    %40 = vector.extract_strided_slice %36 {offsets = [3, 0], sizes = [1, 32], strides = [1, 1]} : vector<8x96xf32> to vector<1x32xf32>
    %41 = vector.extract_strided_slice %36 {offsets = [4, 0], sizes = [1, 32], strides = [1, 1]} : vector<8x96xf32> to vector<1x32xf32>
    %42 = vector.extract_strided_slice %36 {offsets = [5, 0], sizes = [1, 32], strides = [1, 1]} : vector<8x96xf32> to vector<1x32xf32>
    %43 = vector.extract_strided_slice %36 {offsets = [6, 0], sizes = [1, 32], strides = [1, 1]} : vector<8x96xf32> to vector<1x32xf32>
    %44 = vector.extract_strided_slice %36 {offsets = [7, 0], sizes = [1, 32], strides = [1, 1]} : vector<8x96xf32> to vector<1x32xf32>
    %45 = arith.truncf %26 : vector<16x32xf32> to vector<16x32xbf16>
    %cst_24 = arith.constant dense<0.000000e+00> : vector<16x96xf32>
    %46 = tpu.matmul %45, %28, %cst_24 {dimension_numbers = #tpu.dot_dimension_numbers<[1], [0], [0], [1], [0, 0, 1, 1], [], []>} : vector<16x32xbf16>, vector<32x96xbf16>, vector<16x96xf32> -> vector<16x96xf32>
    %47 = vector.broadcast %37 : vector<1x96xf32> to vector<16x96xf32>
    %48 = arith.addf %46, %47 : vector<16x96xf32>
    %49 = vector.extract_strided_slice %48 {offsets = [0, 0], sizes = [16, 32], strides = [1, 1]} : vector<16x96xf32> to vector<16x32xf32>
    %50 = vector.extract_strided_slice %48 {offsets = [0, 32], sizes = [16, 32], strides = [1, 1]} : vector<16x96xf32> to vector<16x32xf32>
    %51 = vector.extract_strided_slice %48 {offsets = [0, 64], sizes = [16, 32], strides = [1, 1]} : vector<16x96xf32> to vector<16x32xf32>
    %52 = vector.extract_strided_slice %1 {offsets = [0, 0], sizes = [1, 8], strides = [1, 1]} : vector<2x8xf32> to vector<1x8xf32>
    %53 = vector.extract_strided_slice %49 {offsets = [0, 0], sizes = [8, 16], strides = [1, 1]} : vector<16x32xf32> to vector<8x16xf32>
    %54 = arith.truncf %53 : vector<8x16xf32> to vector<8x16xbf16>
    %55 = vector.extract_strided_slice %50 {offsets = [0, 0], sizes = [8, 16], strides = [1, 1]} : vector<16x32xf32> to vector<8x16xf32>
    %56 = arith.truncf %55 : vector<8x16xf32> to vector<8x16xbf16>
    %cst_25 = arith.constant dense<0.000000e+00> : vector<8x8xf32>
    %57 = tpu.matmul %54, %56, %cst_25 {dimension_numbers = #tpu.dot_dimension_numbers<[1], [1], [0], [0], [0, 0, 1, 0], [], []>} : vector<8x16xbf16>, vector<8x16xbf16>, vector<8x8xf32> -> vector<8x8xf32>
    %cst_26 = arith.constant 2.500000e-01 : f32
    %58 = vector.broadcast %cst_26 : f32 to vector<8x8xf32>
    %59 = arith.mulf %57, %58 : vector<8x8xf32>
    %60 = vector.broadcast %52 : vector<1x8xf32> to vector<8x8xf32>
    %61 = arith.addf %59, %60 : vector<8x8xf32>
    %62 = vector.extract_strided_slice %49 {offsets = [0, 16], sizes = [8, 16], strides = [1, 1]} : vector<16x32xf32> to vector<8x16xf32>
    %63 = arith.truncf %62 : vector<8x16xf32> to vector<8x16xbf16>
    %64 = vector.extract_strided_slice %50 {offsets = [0, 16], sizes = [8, 16], strides = [1, 1]} : vector<16x32xf32> to vector<8x16xf32>
    %65 = arith.truncf %64 : vector<8x16xf32> to vector<8x16xbf16>
    %cst_27 = arith.constant dense<0.000000e+00> : vector<8x8xf32>
    %66 = tpu.matmul %63, %65, %cst_27 {dimension_numbers = #tpu.dot_dimension_numbers<[1], [1], [0], [0], [0, 0, 1, 0], [], []>} : vector<8x16xbf16>, vector<8x16xbf16>, vector<8x8xf32> -> vector<8x8xf32>
    %cst_28 = arith.constant 2.500000e-01 : f32
    %67 = vector.broadcast %cst_28 : f32 to vector<8x8xf32>
    %68 = arith.mulf %66, %67 : vector<8x8xf32>
    %69 = vector.broadcast %52 : vector<1x8xf32> to vector<8x8xf32>
    %70 = arith.addf %68, %69 : vector<8x8xf32>
    %71 = vector.extract_strided_slice %1 {offsets = [1, 0], sizes = [1, 8], strides = [1, 1]} : vector<2x8xf32> to vector<1x8xf32>
    %72 = vector.extract_strided_slice %49 {offsets = [8, 0], sizes = [8, 16], strides = [1, 1]} : vector<16x32xf32> to vector<8x16xf32>
    %73 = arith.truncf %72 : vector<8x16xf32> to vector<8x16xbf16>
    %74 = vector.extract_strided_slice %50 {offsets = [8, 0], sizes = [8, 16], strides = [1, 1]} : vector<16x32xf32> to vector<8x16xf32>
    %75 = arith.truncf %74 : vector<8x16xf32> to vector<8x16xbf16>
    %cst_29 = arith.constant dense<0.000000e+00> : vector<8x8xf32>
    %76 = tpu.matmul %73, %75, %cst_29 {dimension_numbers = #tpu.dot_dimension_numbers<[1], [1], [0], [0], [0, 0, 1, 0], [], []>} : vector<8x16xbf16>, vector<8x16xbf16>, vector<8x8xf32> -> vector<8x8xf32>
    %cst_30 = arith.constant 2.500000e-01 : f32
    %77 = vector.broadcast %cst_30 : f32 to vector<8x8xf32>
    %78 = arith.mulf %76, %77 : vector<8x8xf32>
    %79 = vector.broadcast %71 : vector<1x8xf32> to vector<8x8xf32>
    %80 = arith.addf %78, %79 : vector<8x8xf32>
    %81 = vector.extract_strided_slice %49 {offsets = [8, 16], sizes = [8, 16], strides = [1, 1]} : vector<16x32xf32> to vector<8x16xf32>
    %82 = arith.truncf %81 : vector<8x16xf32> to vector<8x16xbf16>
    %83 = vector.extract_strided_slice %50 {offsets = [8, 16], sizes = [8, 16], strides = [1, 1]} : vector<16x32xf32> to vector<8x16xf32>
    %84 = arith.truncf %83 : vector<8x16xf32> to vector<8x16xbf16>
    %cst_31 = arith.constant dense<0.000000e+00> : vector<8x8xf32>
    %85 = tpu.matmul %82, %84, %cst_31 {dimension_numbers = #tpu.dot_dimension_numbers<[1], [1], [0], [0], [0, 0, 1, 0], [], []>} : vector<8x16xbf16>, vector<8x16xbf16>, vector<8x8xf32> -> vector<8x8xf32>
    %cst_32 = arith.constant 2.500000e-01 : f32
    %86 = vector.broadcast %cst_32 : f32 to vector<8x8xf32>
    %87 = arith.mulf %85, %86 : vector<8x8xf32>
    %88 = vector.broadcast %71 : vector<1x8xf32> to vector<8x8xf32>
    %89 = arith.addf %87, %88 : vector<8x8xf32>
    %90 = tpu.concatenate %61, %70, %80, %89 in 0 : vector<8x8xf32>, vector<8x8xf32>, vector<8x8xf32>, vector<8x8xf32> -> vector<32x8xf32>
    %cst_33 = arith.constant dense<0xFF800000> : vector<32xf32>
    %91 = vector.multi_reduction <maximumf>, %90, %cst_33 [1] : vector<32x8xf32> to vector<32xf32>
    %92 = vector.shape_cast %91 : vector<32xf32> to vector<32x1xf32>
    %93 = vector.broadcast %92 : vector<32x1xf32> to vector<32x8xf32>
    %94 = arith.subf %90, %93 : vector<32x8xf32>
    %95 = math.exp %94 : vector<32x8xf32>
    %cst_34 = arith.constant dense<0.000000e+00> : vector<32xf32>
    %96 = vector.multi_reduction <add>, %95, %cst_34 [1] : vector<32x8xf32> to vector<32xf32>
    %97 = vector.shape_cast %96 : vector<32xf32> to vector<32x1xf32>
    %98 = tpu.reciprocal %97 {approx = true} : vector<32x1xf32> -> vector<32x1xf32>
    %99 = vector.broadcast %98 : vector<32x1xf32> to vector<32x8xf32>
    %100 = arith.mulf %95, %99 : vector<32x8xf32>
    %101 = vector.extract_strided_slice %100 {offsets = [0, 0], sizes = [8, 8], strides = [1, 1]} : vector<32x8xf32> to vector<8x8xf32>
    %102 = arith.truncf %101 : vector<8x8xf32> to vector<8x8xbf16>
    %103 = vector.extract_strided_slice %51 {offsets = [0, 0], sizes = [8, 16], strides = [1, 1]} : vector<16x32xf32> to vector<8x16xf32>
    %104 = arith.truncf %103 : vector<8x16xf32> to vector<8x16xbf16>
    %cst_35 = arith.constant dense<0.000000e+00> : vector<8x16xf32>
    %105 = tpu.matmul %102, %104, %cst_35 {dimension_numbers = #tpu.dot_dimension_numbers<[1], [0], [0], [1], [0, 0, 1, 1], [], []>} : vector<8x8xbf16>, vector<8x16xbf16>, vector<8x16xf32> -> vector<8x16xf32>
    %106 = vector.extract_strided_slice %100 {offsets = [8, 0], sizes = [8, 8], strides = [1, 1]} : vector<32x8xf32> to vector<8x8xf32>
    %107 = arith.truncf %106 : vector<8x8xf32> to vector<8x8xbf16>
    %108 = vector.extract_strided_slice %51 {offsets = [0, 16], sizes = [8, 16], strides = [1, 1]} : vector<16x32xf32> to vector<8x16xf32>
    %109 = arith.truncf %108 : vector<8x16xf32> to vector<8x16xbf16>
    %cst_36 = arith.constant dense<0.000000e+00> : vector<8x16xf32>
    %110 = tpu.matmul %107, %109, %cst_36 {dimension_numbers = #tpu.dot_dimension_numbers<[1], [0], [0], [1], [0, 0, 1, 1], [], []>} : vector<8x8xbf16>, vector<8x16xbf16>, vector<8x16xf32> -> vector<8x16xf32>
    %111 = tpu.concatenate %105, %110 in 1 : vector<8x16xf32>, vector<8x16xf32> -> vector<8x32xf32>
    %112 = vector.extract_strided_slice %100 {offsets = [16, 0], sizes = [8, 8], strides = [1, 1]} : vector<32x8xf32> to vector<8x8xf32>
    %113 = arith.truncf %112 : vector<8x8xf32> to vector<8x8xbf16>
    %114 = vector.extract_strided_slice %51 {offsets = [8, 0], sizes = [8, 16], strides = [1, 1]} : vector<16x32xf32> to vector<8x16xf32>
    %115 = arith.truncf %114 : vector<8x16xf32> to vector<8x16xbf16>
    %cst_37 = arith.constant dense<0.000000e+00> : vector<8x16xf32>
    %116 = tpu.matmul %113, %115, %cst_37 {dimension_numbers = #tpu.dot_dimension_numbers<[1], [0], [0], [1], [0, 0, 1, 1], [], []>} : vector<8x8xbf16>, vector<8x16xbf16>, vector<8x16xf32> -> vector<8x16xf32>
    %117 = vector.extract_strided_slice %100 {offsets = [24, 0], sizes = [8, 8], strides = [1, 1]} : vector<32x8xf32> to vector<8x8xf32>
    %118 = arith.truncf %117 : vector<8x8xf32> to vector<8x8xbf16>
    %119 = vector.extract_strided_slice %51 {offsets = [8, 16], sizes = [8, 16], strides = [1, 1]} : vector<16x32xf32> to vector<8x16xf32>
    %120 = arith.truncf %119 : vector<8x16xf32> to vector<8x16xbf16>
    %cst_38 = arith.constant dense<0.000000e+00> : vector<8x16xf32>
    %121 = tpu.matmul %118, %120, %cst_38 {dimension_numbers = #tpu.dot_dimension_numbers<[1], [0], [0], [1], [0, 0, 1, 1], [], []>} : vector<8x8xbf16>, vector<8x16xbf16>, vector<8x16xf32> -> vector<8x16xf32>
    %122 = tpu.concatenate %116, %121 in 1 : vector<8x16xf32>, vector<8x16xf32> -> vector<8x32xf32>
    %123 = tpu.concatenate %111, %122 in 0 : vector<8x32xf32>, vector<8x32xf32> -> vector<16x32xf32>
    %124 = arith.truncf %123 : vector<16x32xf32> to vector<16x32xbf16>
    %cst_39 = arith.constant dense<0.000000e+00> : vector<16x32xf32>
    %125 = tpu.matmul %124, %30, %cst_39 {dimension_numbers = #tpu.dot_dimension_numbers<[1], [0], [0], [1], [0, 0, 1, 1], [], []>} : vector<16x32xbf16>, vector<32x32xbf16>, vector<16x32xf32> -> vector<16x32xf32>
    %126 = vector.broadcast %39 : vector<1x32xf32> to vector<16x32xf32>
    %127 = arith.addf %125, %126 : vector<16x32xf32>
    %128 = arith.addf %127, %26 : vector<16x32xf32>
    %cst_40 = arith.constant dense<0.000000e+00> : vector<16xf32>
    %129 = vector.multi_reduction <add>, %128, %cst_40 [1] : vector<16x32xf32> to vector<16xf32>
    %130 = vector.shape_cast %129 : vector<16xf32> to vector<16x1xf32>
    %cst_41 = arith.constant 3.200000e+01 : f32
    %131 = vector.broadcast %cst_41 : f32 to vector<16x1xf32>
    %132 = arith.divf %130, %131 : vector<16x1xf32>
    %133 = vector.broadcast %132 : vector<16x1xf32> to vector<16x32xf32>
    %134 = arith.subf %128, %133 : vector<16x32xf32>
    %135 = arith.mulf %134, %134 : vector<16x32xf32>
    %cst_42 = arith.constant dense<0.000000e+00> : vector<16xf32>
    %136 = vector.multi_reduction <add>, %135, %cst_42 [1] : vector<16x32xf32> to vector<16xf32>
    %137 = vector.shape_cast %136 : vector<16xf32> to vector<16x1xf32>
    %cst_43 = arith.constant 3.200000e+01 : f32
    %138 = vector.broadcast %cst_43 : f32 to vector<16x1xf32>
    %139 = arith.divf %137, %138 : vector<16x1xf32>
    %140 = vector.broadcast %132 : vector<16x1xf32> to vector<16x32xf32>
    %141 = arith.subf %128, %140 : vector<16x32xf32>
    %cst_44 = arith.constant 9.99999996E-13 : f32
    %142 = vector.broadcast %cst_44 : f32 to vector<16x1xf32>
    %143 = arith.addf %139, %142 : vector<16x1xf32>
    %144 = math.rsqrt %143 : vector<16x1xf32>
    %145 = vector.broadcast %144 : vector<16x1xf32> to vector<16x32xf32>
    %146 = arith.mulf %141, %145 : vector<16x32xf32>
    %147 = vector.broadcast %41 : vector<1x32xf32> to vector<16x32xf32>
    %148 = arith.mulf %146, %147 : vector<16x32xf32>
    %149 = vector.broadcast %42 : vector<1x32xf32> to vector<16x32xf32>
    %150 = arith.addf %148, %149 : vector<16x32xf32>
    %151 = arith.truncf %150 : vector<16x32xf32> to vector<16x32xbf16>
    %cst_45 = arith.constant dense<0.000000e+00> : vector<16x64xf32>
    %152 = tpu.matmul %151, %32, %cst_45 {dimension_numbers = #tpu.dot_dimension_numbers<[1], [0], [0], [1], [0, 0, 1, 1], [], []>} : vector<16x32xbf16>, vector<32x64xbf16>, vector<16x64xf32> -> vector<16x64xf32>
    %153 = vector.broadcast %38 : vector<1x64xf32> to vector<16x64xf32>
    %154 = arith.addf %152, %153 : vector<16x64xf32>
    %155 = arith.mulf %154, %154 : vector<16x64xf32>
    %156 = arith.mulf %154, %155 : vector<16x64xf32>
    %cst_46 = arith.constant 4.471500e-02 : f32
    %157 = vector.broadcast %cst_46 : f32 to vector<16x64xf32>
    %158 = arith.mulf %157, %156 : vector<16x64xf32>
    %159 = arith.addf %154, %158 : vector<16x64xf32>
    %cst_47 = arith.constant 0.797884583 : f32
    %160 = vector.broadcast %cst_47 : f32 to vector<16x64xf32>
    %161 = arith.mulf %160, %159 : vector<16x64xf32>
    %162 = math.tanh %161 : vector<16x64xf32>
    %cst_48 = arith.constant 1.000000e+00 : f32
    %163 = vector.broadcast %cst_48 : f32 to vector<16x64xf32>
    %164 = arith.addf %163, %162 : vector<16x64xf32>
    %cst_49 = arith.constant 5.000000e-01 : f32
    %165 = vector.broadcast %cst_49 : f32 to vector<16x64xf32>
    %166 = arith.mulf %165, %164 : vector<16x64xf32>
    %167 = arith.mulf %154, %166 : vector<16x64xf32>
    %168 = arith.truncf %167 : vector<16x64xf32> to vector<16x64xbf16>
    %cst_50 = arith.constant dense<0.000000e+00> : vector<16x32xf32>
    %169 = tpu.matmul %168, %34, %cst_50 {dimension_numbers = #tpu.dot_dimension_numbers<[1], [0], [0], [1], [0, 0, 1, 1], [], []>} : vector<16x64xbf16>, vector<64x32xbf16>, vector<16x32xf32> -> vector<16x32xf32>
    %170 = vector.broadcast %40 : vector<1x32xf32> to vector<16x32xf32>
    %171 = arith.addf %169, %170 : vector<16x32xf32>
    %172 = arith.addf %171, %150 : vector<16x32xf32>
    %cst_51 = arith.constant dense<0.000000e+00> : vector<16xf32>
    %173 = vector.multi_reduction <add>, %172, %cst_51 [1] : vector<16x32xf32> to vector<16xf32>
    %174 = vector.shape_cast %173 : vector<16xf32> to vector<16x1xf32>
    %cst_52 = arith.constant 3.200000e+01 : f32
    %175 = vector.broadcast %cst_52 : f32 to vector<16x1xf32>
    %176 = arith.divf %174, %175 : vector<16x1xf32>
    %177 = vector.broadcast %176 : vector<16x1xf32> to vector<16x32xf32>
    %178 = arith.subf %172, %177 : vector<16x32xf32>
    %179 = arith.mulf %178, %178 : vector<16x32xf32>
    %cst_53 = arith.constant dense<0.000000e+00> : vector<16xf32>
    %180 = vector.multi_reduction <add>, %179, %cst_53 [1] : vector<16x32xf32> to vector<16xf32>
    %181 = vector.shape_cast %180 : vector<16xf32> to vector<16x1xf32>
    %cst_54 = arith.constant 3.200000e+01 : f32
    %182 = vector.broadcast %cst_54 : f32 to vector<16x1xf32>
    %183 = arith.divf %181, %182 : vector<16x1xf32>
    %184 = vector.broadcast %176 : vector<16x1xf32> to vector<16x32xf32>
    %185 = arith.subf %172, %184 : vector<16x32xf32>
    %cst_55 = arith.constant 9.99999996E-13 : f32
    %186 = vector.broadcast %cst_55 : f32 to vector<16x1xf32>
    %187 = arith.addf %183, %186 : vector<16x1xf32>
    %188 = math.rsqrt %187 : vector<16x1xf32>
    %189 = vector.broadcast %188 : vector<16x1xf32> to vector<16x32xf32>
    %190 = arith.mulf %185, %189 : vector<16x32xf32>
    %191 = vector.broadcast %43 : vector<1x32xf32> to vector<16x32xf32>
    %192 = arith.mulf %190, %191 : vector<16x32xf32>
    %193 = vector.broadcast %44 : vector<1x32xf32> to vector<16x32xf32>
    %194 = arith.addf %192, %193 : vector<16x32xf32>
    %c1 = arith.constant 1 : index
    %c0_56 = arith.constant 0 : index
    %c0_57 = arith.constant 0 : index
    %195 = vector.load %arg3[%c1, %c0_56, %c0_57] : memref<2x32x96xbf16, #tpu.memory_space<vmem>>, vector<1x32x96xbf16>
    %196 = vector.shape_cast %195 : vector<1x32x96xbf16> to vector<32x96xbf16>
    %c1_58 = arith.constant 1 : index
    %c0_59 = arith.constant 0 : index
    %c0_60 = arith.constant 0 : index
    %197 = vector.load %arg4[%c1_58, %c0_59, %c0_60] : memref<2x32x32xbf16, #tpu.memory_space<vmem>>, vector<1x32x32xbf16>
    %198 = vector.shape_cast %197 : vector<1x32x32xbf16> to vector<32x32xbf16>
    %c1_61 = arith.constant 1 : index
    %c0_62 = arith.constant 0 : index
    %c0_63 = arith.constant 0 : index
    %199 = vector.load %arg5[%c1_61, %c0_62, %c0_63] : memref<2x32x64xbf16, #tpu.memory_space<vmem>>, vector<1x32x64xbf16>
    %200 = vector.shape_cast %199 : vector<1x32x64xbf16> to vector<32x64xbf16>
    %c1_64 = arith.constant 1 : index
    %c0_65 = arith.constant 0 : index
    %c0_66 = arith.constant 0 : index
    %201 = vector.load %arg6[%c1_64, %c0_65, %c0_66] : memref<2x64x32xbf16, #tpu.memory_space<vmem>>, vector<1x64x32xbf16>
    %202 = vector.shape_cast %201 : vector<1x64x32xbf16> to vector<64x32xbf16>
    %c1_67 = arith.constant 1 : index
    %c0_68 = arith.constant 0 : index
    %c0_69 = arith.constant 0 : index
    %203 = vector.load %arg7[%c1_67, %c0_68, %c0_69] : memref<2x8x96xf32, #tpu.memory_space<vmem>>, vector<1x8x96xf32>
    %204 = vector.shape_cast %203 : vector<1x8x96xf32> to vector<8x96xf32>
    %205 = vector.extract_strided_slice %204 {offsets = [0, 0], sizes = [1, 96], strides = [1, 1]} : vector<8x96xf32> to vector<1x96xf32>
    %206 = vector.extract_strided_slice %204 {offsets = [1, 0], sizes = [1, 64], strides = [1, 1]} : vector<8x96xf32> to vector<1x64xf32>
    %207 = vector.extract_strided_slice %204 {offsets = [2, 0], sizes = [1, 32], strides = [1, 1]} : vector<8x96xf32> to vector<1x32xf32>
    %208 = vector.extract_strided_slice %204 {offsets = [3, 0], sizes = [1, 32], strides = [1, 1]} : vector<8x96xf32> to vector<1x32xf32>
    %209 = vector.extract_strided_slice %204 {offsets = [4, 0], sizes = [1, 32], strides = [1, 1]} : vector<8x96xf32> to vector<1x32xf32>
    %210 = vector.extract_strided_slice %204 {offsets = [5, 0], sizes = [1, 32], strides = [1, 1]} : vector<8x96xf32> to vector<1x32xf32>
    %211 = vector.extract_strided_slice %204 {offsets = [6, 0], sizes = [1, 32], strides = [1, 1]} : vector<8x96xf32> to vector<1x32xf32>
    %212 = vector.extract_strided_slice %204 {offsets = [7, 0], sizes = [1, 32], strides = [1, 1]} : vector<8x96xf32> to vector<1x32xf32>
    %213 = arith.truncf %194 : vector<16x32xf32> to vector<16x32xbf16>
    %cst_70 = arith.constant dense<0.000000e+00> : vector<16x96xf32>
    %214 = tpu.matmul %213, %196, %cst_70 {dimension_numbers = #tpu.dot_dimension_numbers<[1], [0], [0], [1], [0, 0, 1, 1], [], []>} : vector<16x32xbf16>, vector<32x96xbf16>, vector<16x96xf32> -> vector<16x96xf32>
    %215 = vector.broadcast %205 : vector<1x96xf32> to vector<16x96xf32>
    %216 = arith.addf %214, %215 : vector<16x96xf32>
    %217 = vector.extract_strided_slice %216 {offsets = [0, 0], sizes = [16, 32], strides = [1, 1]} : vector<16x96xf32> to vector<16x32xf32>
    %218 = vector.extract_strided_slice %216 {offsets = [0, 32], sizes = [16, 32], strides = [1, 1]} : vector<16x96xf32> to vector<16x32xf32>
    %219 = vector.extract_strided_slice %216 {offsets = [0, 64], sizes = [16, 32], strides = [1, 1]} : vector<16x96xf32> to vector<16x32xf32>
    %220 = vector.extract_strided_slice %1 {offsets = [0, 0], sizes = [1, 8], strides = [1, 1]} : vector<2x8xf32> to vector<1x8xf32>
    %221 = vector.extract_strided_slice %217 {offsets = [0, 0], sizes = [8, 16], strides = [1, 1]} : vector<16x32xf32> to vector<8x16xf32>
    %222 = arith.truncf %221 : vector<8x16xf32> to vector<8x16xbf16>
    %223 = vector.extract_strided_slice %218 {offsets = [0, 0], sizes = [8, 16], strides = [1, 1]} : vector<16x32xf32> to vector<8x16xf32>
    %224 = arith.truncf %223 : vector<8x16xf32> to vector<8x16xbf16>
    %cst_71 = arith.constant dense<0.000000e+00> : vector<8x8xf32>
    %225 = tpu.matmul %222, %224, %cst_71 {dimension_numbers = #tpu.dot_dimension_numbers<[1], [1], [0], [0], [0, 0, 1, 0], [], []>} : vector<8x16xbf16>, vector<8x16xbf16>, vector<8x8xf32> -> vector<8x8xf32>
    %cst_72 = arith.constant 2.500000e-01 : f32
    %226 = vector.broadcast %cst_72 : f32 to vector<8x8xf32>
    %227 = arith.mulf %225, %226 : vector<8x8xf32>
    %228 = vector.broadcast %220 : vector<1x8xf32> to vector<8x8xf32>
    %229 = arith.addf %227, %228 : vector<8x8xf32>
    %230 = vector.extract_strided_slice %217 {offsets = [0, 16], sizes = [8, 16], strides = [1, 1]} : vector<16x32xf32> to vector<8x16xf32>
    %231 = arith.truncf %230 : vector<8x16xf32> to vector<8x16xbf16>
    %232 = vector.extract_strided_slice %218 {offsets = [0, 16], sizes = [8, 16], strides = [1, 1]} : vector<16x32xf32> to vector<8x16xf32>
    %233 = arith.truncf %232 : vector<8x16xf32> to vector<8x16xbf16>
    %cst_73 = arith.constant dense<0.000000e+00> : vector<8x8xf32>
    %234 = tpu.matmul %231, %233, %cst_73 {dimension_numbers = #tpu.dot_dimension_numbers<[1], [1], [0], [0], [0, 0, 1, 0], [], []>} : vector<8x16xbf16>, vector<8x16xbf16>, vector<8x8xf32> -> vector<8x8xf32>
    %cst_74 = arith.constant 2.500000e-01 : f32
    %235 = vector.broadcast %cst_74 : f32 to vector<8x8xf32>
    %236 = arith.mulf %234, %235 : vector<8x8xf32>
    %237 = vector.broadcast %220 : vector<1x8xf32> to vector<8x8xf32>
    %238 = arith.addf %236, %237 : vector<8x8xf32>
    %239 = vector.extract_strided_slice %1 {offsets = [1, 0], sizes = [1, 8], strides = [1, 1]} : vector<2x8xf32> to vector<1x8xf32>
    %240 = vector.extract_strided_slice %217 {offsets = [8, 0], sizes = [8, 16], strides = [1, 1]} : vector<16x32xf32> to vector<8x16xf32>
    %241 = arith.truncf %240 : vector<8x16xf32> to vector<8x16xbf16>
    %242 = vector.extract_strided_slice %218 {offsets = [8, 0], sizes = [8, 16], strides = [1, 1]} : vector<16x32xf32> to vector<8x16xf32>
    %243 = arith.truncf %242 : vector<8x16xf32> to vector<8x16xbf16>
    %cst_75 = arith.constant dense<0.000000e+00> : vector<8x8xf32>
    %244 = tpu.matmul %241, %243, %cst_75 {dimension_numbers = #tpu.dot_dimension_numbers<[1], [1], [0], [0], [0, 0, 1, 0], [], []>} : vector<8x16xbf16>, vector<8x16xbf16>, vector<8x8xf32> -> vector<8x8xf32>
    %cst_76 = arith.constant 2.500000e-01 : f32
    %245 = vector.broadcast %cst_76 : f32 to vector<8x8xf32>
    %246 = arith.mulf %244, %245 : vector<8x8xf32>
    %247 = vector.broadcast %239 : vector<1x8xf32> to vector<8x8xf32>
    %248 = arith.addf %246, %247 : vector<8x8xf32>
    %249 = vector.extract_strided_slice %217 {offsets = [8, 16], sizes = [8, 16], strides = [1, 1]} : vector<16x32xf32> to vector<8x16xf32>
    %250 = arith.truncf %249 : vector<8x16xf32> to vector<8x16xbf16>
    %251 = vector.extract_strided_slice %218 {offsets = [8, 16], sizes = [8, 16], strides = [1, 1]} : vector<16x32xf32> to vector<8x16xf32>
    %252 = arith.truncf %251 : vector<8x16xf32> to vector<8x16xbf16>
    %cst_77 = arith.constant dense<0.000000e+00> : vector<8x8xf32>
    %253 = tpu.matmul %250, %252, %cst_77 {dimension_numbers = #tpu.dot_dimension_numbers<[1], [1], [0], [0], [0, 0, 1, 0], [], []>} : vector<8x16xbf16>, vector<8x16xbf16>, vector<8x8xf32> -> vector<8x8xf32>
    %cst_78 = arith.constant 2.500000e-01 : f32
    %254 = vector.broadcast %cst_78 : f32 to vector<8x8xf32>
    %255 = arith.mulf %253, %254 : vector<8x8xf32>
    %256 = vector.broadcast %239 : vector<1x8xf32> to vector<8x8xf32>
    %257 = arith.addf %255, %256 : vector<8x8xf32>
    %258 = tpu.concatenate %229, %238, %248, %257 in 0 : vector<8x8xf32>, vector<8x8xf32>, vector<8x8xf32>, vector<8x8xf32> -> vector<32x8xf32>
    %cst_79 = arith.constant dense<0xFF800000> : vector<32xf32>
    %259 = vector.multi_reduction <maximumf>, %258, %cst_79 [1] : vector<32x8xf32> to vector<32xf32>
    %260 = vector.shape_cast %259 : vector<32xf32> to vector<32x1xf32>
    %261 = vector.broadcast %260 : vector<32x1xf32> to vector<32x8xf32>
    %262 = arith.subf %258, %261 : vector<32x8xf32>
    %263 = math.exp %262 : vector<32x8xf32>
    %cst_80 = arith.constant dense<0.000000e+00> : vector<32xf32>
    %264 = vector.multi_reduction <add>, %263, %cst_80 [1] : vector<32x8xf32> to vector<32xf32>
    %265 = vector.shape_cast %264 : vector<32xf32> to vector<32x1xf32>
    %266 = tpu.reciprocal %265 {approx = true} : vector<32x1xf32> -> vector<32x1xf32>
    %267 = vector.broadcast %266 : vector<32x1xf32> to vector<32x8xf32>
    %268 = arith.mulf %263, %267 : vector<32x8xf32>
    %269 = vector.extract_strided_slice %268 {offsets = [0, 0], sizes = [8, 8], strides = [1, 1]} : vector<32x8xf32> to vector<8x8xf32>
    %270 = arith.truncf %269 : vector<8x8xf32> to vector<8x8xbf16>
    %271 = vector.extract_strided_slice %219 {offsets = [0, 0], sizes = [8, 16], strides = [1, 1]} : vector<16x32xf32> to vector<8x16xf32>
    %272 = arith.truncf %271 : vector<8x16xf32> to vector<8x16xbf16>
    %cst_81 = arith.constant dense<0.000000e+00> : vector<8x16xf32>
    %273 = tpu.matmul %270, %272, %cst_81 {dimension_numbers = #tpu.dot_dimension_numbers<[1], [0], [0], [1], [0, 0, 1, 1], [], []>} : vector<8x8xbf16>, vector<8x16xbf16>, vector<8x16xf32> -> vector<8x16xf32>
    %274 = vector.extract_strided_slice %268 {offsets = [8, 0], sizes = [8, 8], strides = [1, 1]} : vector<32x8xf32> to vector<8x8xf32>
    %275 = arith.truncf %274 : vector<8x8xf32> to vector<8x8xbf16>
    %276 = vector.extract_strided_slice %219 {offsets = [0, 16], sizes = [8, 16], strides = [1, 1]} : vector<16x32xf32> to vector<8x16xf32>
    %277 = arith.truncf %276 : vector<8x16xf32> to vector<8x16xbf16>
    %cst_82 = arith.constant dense<0.000000e+00> : vector<8x16xf32>
    %278 = tpu.matmul %275, %277, %cst_82 {dimension_numbers = #tpu.dot_dimension_numbers<[1], [0], [0], [1], [0, 0, 1, 1], [], []>} : vector<8x8xbf16>, vector<8x16xbf16>, vector<8x16xf32> -> vector<8x16xf32>
    %279 = tpu.concatenate %273, %278 in 1 : vector<8x16xf32>, vector<8x16xf32> -> vector<8x32xf32>
    %280 = vector.extract_strided_slice %268 {offsets = [16, 0], sizes = [8, 8], strides = [1, 1]} : vector<32x8xf32> to vector<8x8xf32>
    %281 = arith.truncf %280 : vector<8x8xf32> to vector<8x8xbf16>
    %282 = vector.extract_strided_slice %219 {offsets = [8, 0], sizes = [8, 16], strides = [1, 1]} : vector<16x32xf32> to vector<8x16xf32>
    %283 = arith.truncf %282 : vector<8x16xf32> to vector<8x16xbf16>
    %cst_83 = arith.constant dense<0.000000e+00> : vector<8x16xf32>
    %284 = tpu.matmul %281, %283, %cst_83 {dimension_numbers = #tpu.dot_dimension_numbers<[1], [0], [0], [1], [0, 0, 1, 1], [], []>} : vector<8x8xbf16>, vector<8x16xbf16>, vector<8x16xf32> -> vector<8x16xf32>
    %285 = vector.extract_strided_slice %268 {offsets = [24, 0], sizes = [8, 8], strides = [1, 1]} : vector<32x8xf32> to vector<8x8xf32>
    %286 = arith.truncf %285 : vector<8x8xf32> to vector<8x8xbf16>
    %287 = vector.extract_strided_slice %219 {offsets = [8, 16], sizes = [8, 16], strides = [1, 1]} : vector<16x32xf32> to vector<8x16xf32>
    %288 = arith.truncf %287 : vector<8x16xf32> to vector<8x16xbf16>
    %cst_84 = arith.constant dense<0.000000e+00> : vector<8x16xf32>
    %289 = tpu.matmul %286, %288, %cst_84 {dimension_numbers = #tpu.dot_dimension_numbers<[1], [0], [0], [1], [0, 0, 1, 1], [], []>} : vector<8x8xbf16>, vector<8x16xbf16>, vector<8x16xf32> -> vector<8x16xf32>
    %290 = tpu.concatenate %284, %289 in 1 : vector<8x16xf32>, vector<8x16xf32> -> vector<8x32xf32>
    %291 = tpu.concatenate %279, %290 in 0 : vector<8x32xf32>, vector<8x32xf32> -> vector<16x32xf32>
    %292 = arith.truncf %291 : vector<16x32xf32> to vector<16x32xbf16>
    %cst_85 = arith.constant dense<0.000000e+00> : vector<16x32xf32>
    %293 = tpu.matmul %292, %198, %cst_85 {dimension_numbers = #tpu.dot_dimension_numbers<[1], [0], [0], [1], [0, 0, 1, 1], [], []>} : vector<16x32xbf16>, vector<32x32xbf16>, vector<16x32xf32> -> vector<16x32xf32>
    %294 = vector.broadcast %207 : vector<1x32xf32> to vector<16x32xf32>
    %295 = arith.addf %293, %294 : vector<16x32xf32>
    %296 = arith.addf %295, %194 : vector<16x32xf32>
    %cst_86 = arith.constant dense<0.000000e+00> : vector<16xf32>
    %297 = vector.multi_reduction <add>, %296, %cst_86 [1] : vector<16x32xf32> to vector<16xf32>
    %298 = vector.shape_cast %297 : vector<16xf32> to vector<16x1xf32>
    %cst_87 = arith.constant 3.200000e+01 : f32
    %299 = vector.broadcast %cst_87 : f32 to vector<16x1xf32>
    %300 = arith.divf %298, %299 : vector<16x1xf32>
    %301 = vector.broadcast %300 : vector<16x1xf32> to vector<16x32xf32>
    %302 = arith.subf %296, %301 : vector<16x32xf32>
    %303 = arith.mulf %302, %302 : vector<16x32xf32>
    %cst_88 = arith.constant dense<0.000000e+00> : vector<16xf32>
    %304 = vector.multi_reduction <add>, %303, %cst_88 [1] : vector<16x32xf32> to vector<16xf32>
    %305 = vector.shape_cast %304 : vector<16xf32> to vector<16x1xf32>
    %cst_89 = arith.constant 3.200000e+01 : f32
    %306 = vector.broadcast %cst_89 : f32 to vector<16x1xf32>
    %307 = arith.divf %305, %306 : vector<16x1xf32>
    %308 = vector.broadcast %300 : vector<16x1xf32> to vector<16x32xf32>
    %309 = arith.subf %296, %308 : vector<16x32xf32>
    %cst_90 = arith.constant 9.99999996E-13 : f32
    %310 = vector.broadcast %cst_90 : f32 to vector<16x1xf32>
    %311 = arith.addf %307, %310 : vector<16x1xf32>
    %312 = math.rsqrt %311 : vector<16x1xf32>
    %313 = vector.broadcast %312 : vector<16x1xf32> to vector<16x32xf32>
    %314 = arith.mulf %309, %313 : vector<16x32xf32>
    %315 = vector.broadcast %209 : vector<1x32xf32> to vector<16x32xf32>
    %316 = arith.mulf %314, %315 : vector<16x32xf32>
    %317 = vector.broadcast %210 : vector<1x32xf32> to vector<16x32xf32>
    %318 = arith.addf %316, %317 : vector<16x32xf32>
    %319 = arith.truncf %318 : vector<16x32xf32> to vector<16x32xbf16>
    %cst_91 = arith.constant dense<0.000000e+00> : vector<16x64xf32>
    %320 = tpu.matmul %319, %200, %cst_91 {dimension_numbers = #tpu.dot_dimension_numbers<[1], [0], [0], [1], [0, 0, 1, 1], [], []>} : vector<16x32xbf16>, vector<32x64xbf16>, vector<16x64xf32> -> vector<16x64xf32>
    %321 = vector.broadcast %206 : vector<1x64xf32> to vector<16x64xf32>
    %322 = arith.addf %320, %321 : vector<16x64xf32>
    %323 = arith.mulf %322, %322 : vector<16x64xf32>
    %324 = arith.mulf %322, %323 : vector<16x64xf32>
    %cst_92 = arith.constant 4.471500e-02 : f32
    %325 = vector.broadcast %cst_92 : f32 to vector<16x64xf32>
    %326 = arith.mulf %325, %324 : vector<16x64xf32>
    %327 = arith.addf %322, %326 : vector<16x64xf32>
    %cst_93 = arith.constant 0.797884583 : f32
    %328 = vector.broadcast %cst_93 : f32 to vector<16x64xf32>
    %329 = arith.mulf %328, %327 : vector<16x64xf32>
    %330 = math.tanh %329 : vector<16x64xf32>
    %cst_94 = arith.constant 1.000000e+00 : f32
    %331 = vector.broadcast %cst_94 : f32 to vector<16x64xf32>
    %332 = arith.addf %331, %330 : vector<16x64xf32>
    %cst_95 = arith.constant 5.000000e-01 : f32
    %333 = vector.broadcast %cst_95 : f32 to vector<16x64xf32>
    %334 = arith.mulf %333, %332 : vector<16x64xf32>
    %335 = arith.mulf %322, %334 : vector<16x64xf32>
    %336 = arith.truncf %335 : vector<16x64xf32> to vector<16x64xbf16>
    %cst_96 = arith.constant dense<0.000000e+00> : vector<16x32xf32>
    %337 = tpu.matmul %336, %202, %cst_96 {dimension_numbers = #tpu.dot_dimension_numbers<[1], [0], [0], [1], [0, 0, 1, 1], [], []>} : vector<16x64xbf16>, vector<64x32xbf16>, vector<16x32xf32> -> vector<16x32xf32>
    %338 = vector.broadcast %208 : vector<1x32xf32> to vector<16x32xf32>
    %339 = arith.addf %337, %338 : vector<16x32xf32>
    %340 = arith.addf %339, %318 : vector<16x32xf32>
    %cst_97 = arith.constant dense<0.000000e+00> : vector<16xf32>
    %341 = vector.multi_reduction <add>, %340, %cst_97 [1] : vector<16x32xf32> to vector<16xf32>
    %342 = vector.shape_cast %341 : vector<16xf32> to vector<16x1xf32>
    %cst_98 = arith.constant 3.200000e+01 : f32
    %343 = vector.broadcast %cst_98 : f32 to vector<16x1xf32>
    %344 = arith.divf %342, %343 : vector<16x1xf32>
    %345 = vector.broadcast %344 : vector<16x1xf32> to vector<16x32xf32>
    %346 = arith.subf %340, %345 : vector<16x32xf32>
    %347 = arith.mulf %346, %346 : vector<16x32xf32>
    %cst_99 = arith.constant dense<0.000000e+00> : vector<16xf32>
    %348 = vector.multi_reduction <add>, %347, %cst_99 [1] : vector<16x32xf32> to vector<16xf32>
    %349 = vector.shape_cast %348 : vector<16xf32> to vector<16x1xf32>
    %cst_100 = arith.constant 3.200000e+01 : f32
    %350 = vector.broadcast %cst_100 : f32 to vector<16x1xf32>
    %351 = arith.divf %349, %350 : vector<16x1xf32>
    %352 = vector.broadcast %344 : vector<16x1xf32> to vector<16x32xf32>
    %353 = arith.subf %340, %352 : vector<16x32xf32>
    %cst_101 = arith.constant 9.99999996E-13 : f32
    %354 = vector.broadcast %cst_101 : f32 to vector<16x1xf32>
    %355 = arith.addf %351, %354 : vector<16x1xf32>
    %356 = math.rsqrt %355 : vector<16x1xf32>
    %357 = vector.broadcast %356 : vector<16x1xf32> to vector<16x32xf32>
    %358 = arith.mulf %353, %357 : vector<16x32xf32>
    %359 = vector.broadcast %211 : vector<1x32xf32> to vector<16x32xf32>
    %360 = arith.mulf %358, %359 : vector<16x32xf32>
    %361 = vector.broadcast %212 : vector<1x32xf32> to vector<16x32xf32>
    %362 = arith.addf %360, %361 : vector<16x32xf32>
    %363 = vector.shape_cast %362 : vector<16x32xf32> to vector<2x8x32xf32>
    %364 = vector.extract_strided_slice %363 {offsets = [0, 0, 0], sizes = [2, 1, 32], strides = [1, 1, 1]} : vector<2x8x32xf32> to vector<2x1x32xf32>
    %365 = vector.shape_cast %364 : vector<2x1x32xf32> to vector<2x32xf32>
    %366 = arith.truncf %365 : vector<2x32xf32> to vector<2x32xbf16>
    %c0_102 = arith.constant 0 : index
    %c0_103 = arith.constant 0 : index
    %367 = vector.load %arg8[%c0_102, %c0_103] : memref<32x32xbf16, #tpu.memory_space<vmem>>, vector<32x32xbf16>
    %cst_104 = arith.constant dense<0.000000e+00> : vector<2x32xf32>
    %368 = tpu.matmul %366, %367, %cst_104 {dimension_numbers = #tpu.dot_dimension_numbers<[1], [0], [0], [1], [0, 0, 1, 1], [], []>} : vector<2x32xbf16>, vector<32x32xbf16>, vector<2x32xf32> -> vector<2x32xf32>
    %369 = vector.extract_strided_slice %2 {offsets = [2, 0], sizes = [1, 32], strides = [1, 1]} : vector<3x32xf32> to vector<1x32xf32>
    %370 = vector.broadcast %369 : vector<1x32xf32> to vector<2x32xf32>
    %371 = arith.addf %368, %370 : vector<2x32xf32>
    %372 = math.tanh %371 : vector<2x32xf32>
    %c0_105 = arith.constant 0 : index
    %c0_106 = arith.constant 0 : index
    %373 = vector.load %arg9[%c0_105, %c0_106] : memref<2x32xf32, #tpu.memory_space<vmem>>, vector<2x32xf32>
    tpu.vector_store %arg9[%c0_105, %c0_106], %372 {strides = array<i32>} : memref<2x32xf32, #tpu.memory_space<vmem>>, vector<2x32xf32>,
    return
  }
}

</mosaic_0001>

<llo_original>
// kernel: bert_forward.1
$region0: #{bert_forward.1}
  #allocation0 [shape = 'u32[]', space=smem, size = 0x4, offset = 0x4, fixed_abs, tag = 'smem constant byte address 0x4 - core index']
  #allocation1 [shape = 'u32[144,128]{1,0:T(1,128)}', space=vmem, size = 0x12000, scoped, tag = 'internal scratch']
  %s0 = inlined_call_operand.vmem [shape: f32[16,32], index: 0, kind: input, shape index: {}]
  %s1 = inlined_call_operand.vmem [shape: f32[2,8], index: 1, kind: input, shape index: {}]
  %s2 = inlined_call_operand.vmem [shape: f32[3,32], index: 2, kind: input, shape index: {}]
  %s3 = inlined_call_operand.vmem [shape: bf16[2,32,96], index: 3, kind: input, shape index: {}]
  %s4 = inlined_call_operand.vmem [shape: bf16[2,32,32], index: 4, kind: input, shape index: {}]
  %s5 = inlined_call_operand.vmem [shape: bf16[2,32,64], index: 5, kind: input, shape index: {}]
  %s6 = inlined_call_operand.vmem [shape: bf16[2,64,32], index: 6, kind: input, shape index: {}]
  %s7 = inlined_call_operand.vmem [shape: f32[2,8,96], index: 7, kind: input, shape index: {}]
  %s8 = inlined_call_operand.vmem [shape: bf16[32,32], index: 8, kind: input, shape index: {}]
  %s9 = inlined_call_operand.hbm [shape: f32[2,32], index: 9, kind: output, shape index: {}]
  %s10 = sld [smem:[#allocation0]]
  $region46: #{bert_forward.1} parent=0
    _
  %s12 = ssub.s32 1, %s10
  %s13 = scalar_select 0, %s12, %s10
  $region1: #{bert_forward.1} parent=0
    #allocation2 [shape = 'u8[1024]{0}', space=vmem, size = 0x400, scoped, tag = 'output window, operand 0, single buffered']
    #allocation3 [shape = 's32[1]{0}', space=sflag, size = 0x4, scoped, tag = 'scoped memory for bert_forward.1']
    %14 = vsyncpa [#allocation3], 0
    // Predicated region
    $region2: #{bert_forward.1} parent=1 // pred_check
      _
    $region3: #{bert_forward.1} parent=1 // pred_check_branch
      %16 = sbr.rel (0) target = $region5
    $region4: #{bert_forward.1} parent=1 // pred_region
      _
    $region5: #{bert_forward.1} parent=1 // pred_fallthru
      _
    // Predicated region
    $region6: #{bert_forward.1} parent=1 // pred_check
      _
    $region7: #{bert_forward.1} parent=1 // pred_check_branch
      %18 = sbr.rel (0) target = $region9
    $region8: #{bert_forward.1} parent=1 // pred_region
      _
    $region9: #{bert_forward.1} parent=1 // pred_fallthru
      _
    // Predicated region
    $region10: #{bert_forward.1} parent=1 // pred_check
      _
    $region11: #{bert_forward.1} parent=1 // pred_check_branch
      %20 = sbr.rel (0) target = $region13
    $region12: #{bert_forward.1} parent=1 // pred_region
      _
    $region13: #{bert_forward.1} parent=1 // pred_fallthru
      _
    // Predicated region
    $region14: #{bert_forward.1} parent=1 // pred_check
      _
    $region15: #{bert_forward.1} parent=1 // pred_check_branch
      %22 = sbr.rel (0) target = $region17
    $region16: #{bert_forward.1} parent=1 // pred_region
      _
    $region17: #{bert_forward.1} parent=1 // pred_fallthru
      _
    // Predicated region
    $region18: #{bert_forward.1} parent=1 // pred_check
      _
    $region19: #{bert_forward.1} parent=1 // pred_check_branch
      %24 = sbr.rel (0) target = $region21
    $region20: #{bert_forward.1} parent=1 // pred_region
      _
    $region21: #{bert_forward.1} parent=1 // pred_fallthru
      _
    // Predicated region
    $region22: #{bert_forward.1} parent=1 // pred_check
      _
    $region23: #{bert_forward.1} parent=1 // pred_check_branch
      %26 = sbr.rel (0) target = $region25
    $region24: #{bert_forward.1} parent=1 // pred_region
      _
    $region25: #{bert_forward.1} parent=1 // pred_fallthru
      _
    // Predicated region
    $region26: #{bert_forward.1} parent=1 // pred_check
      _
    $region27: #{bert_forward.1} parent=1 // pred_check_branch
      %28 = sbr.rel (0) target = $region29
    $region28: #{bert_forward.1} parent=1 // pred_region
      _
    $region29: #{bert_forward.1} parent=1 // pred_fallthru
      _
    // Predicated region
    $region30: #{bert_forward.1} parent=1 // pred_check
      _
    $region31: #{bert_forward.1} parent=1 // pred_check_branch
      %30 = sbr.rel (0) target = $region33
    $region32: #{bert_forward.1} parent=1 // pred_region
      _
    $region33: #{bert_forward.1} parent=1 // pred_fallthru
      _
    // Predicated region
    $region34: #{bert_forward.1} parent=1 // pred_check
      _
    $region35: #{bert_forward.1} parent=1 // pred_check_branch
      %32 = sbr.rel (0) target = $region37
    $region36: #{bert_forward.1} parent=1 // pred_region
      _
    $region37: #{bert_forward.1} parent=1 // pred_fallthru
      _
    %v34 = vld [vmem:[%s0] sm:$0xff]
    %v35 = vld [vmem:[%s0 + $0x8] sm:$0xff]
    %v36 = vld [vmem:[%s1] sm:$0x3]
    %v37 = vld [vmem:[%s2] sm:$0x7]
    %vm38 = vcmask 261120
    %v39 = vsel %vm38, %v34, 0.0
    %40 = vadd.xlane.f32.xlu0 %v39
    %v41 = vpop.xlane.xlu0 %40
    %v42 = vsel %vm38, %v35, 0.0
    %43 = vadd.xlane.f32.xlu0 %v42
    %v44 = vpop.xlane.xlu0 %43
    %v45 = vrcp.pop 32.0
    %v46 = vmul.f32 %v41, %v45
    %v47 = vmul.f32 %v44, %v45
    %v48 = vsub.f32 %v34, %v46
    %v49 = vsub.f32 %v35, %v47
    %v50 = vmul.f32 %v48, %v48
    %v51 = vmul.f32 %v49, %v49
    %v52 = vsel %vm38, %v50, 0.0
    %53 = vadd.xlane.f32.xlu0 %v52
    %v54 = vpop.xlane.xlu0 %53
    %v55 = vsel %vm38, %v51, 0.0
    %56 = vadd.xlane.f32.xlu0 %v55
    %v57 = vpop.xlane.xlu0 %56
    %v58 = vmul.f32 %v54, %v45
    %v59 = vmul.f32 %v57, %v45
    %v60 = vadd.f32 %v58, 1e-12
    %v61 = vadd.f32 %v59, 1e-12
    %v62 = vrsqrt.pop %v60
    %v63 = vrsqrt.pop %v61
    %v64 = vmul.f32 %v48, %v62
    %v65 = vmul.f32 %v49, %v63
    %v66 = vlaneseq
    %v67 = vshrl.u32 %v66, 7
    %v68 = vsub.s32 0, %v67
    %v69 = vrot.slane %v37, %v68
    %v70 = vmul.f32 %v64, %v69
    %v71 = vmul.f32 %v65, %v69
    %v72 = vlaneseq
    %v73 = vshrl.u32 %v72, 7
    %v74 = vsub.s32 1, %v73
    %v75 = vrot.slane %v37, %v74
    %v76 = vadd.f32 %v70, %v75
    %v77 = vadd.f32 %v71, %v75
    %v78 = vld [vmem:[%s3] sm:$0xf]
    %v79 = vld [vmem:[%s3 + $0x4] sm:$0xf]
    %v80 = vld [vmem:[%s3 + $0x8] sm:$0xf]
    %v81 = vld [vmem:[%s3 + $0xc] sm:$0xf]
    %v82 = vld [vmem:[%s4] sm:$0xf]
    %v83 = vld [vmem:[%s4 + $0x4] sm:$0xf]
    %v84 = vld [vmem:[%s4 + $0x8] sm:$0xf]
    %v85 = vld [vmem:[%s4 + $0xc] sm:$0xf]
    %v86 = vld [vmem:[%s5] sm:$0xf]
    %v87 = vld [vmem:[%s5 + $0x4] sm:$0xf]
    %v88 = vld [vmem:[%s5 + $0x8] sm:$0xf]
    %v89 = vld [vmem:[%s5 + $0xc] sm:$0xf]
    %v90 = vld [vmem:[%s6] sm:$0xf]
    %v91 = vld [vmem:[%s6 + $0x4] sm:$0xf]
    %v92 = vld [vmem:[%s6 + $0x8] sm:$0xf]
    %v93 = vld [vmem:[%s6 + $0xc] sm:$0xf]
    %v94 = vld [vmem:[%s6 + $0x10] sm:$0xf]
    %v95 = vld [vmem:[%s6 + $0x14] sm:$0xf]
    %v96 = vld [vmem:[%s6 + $0x18] sm:$0xf]
    %v97 = vld [vmem:[%s6 + $0x1c] sm:$0xf]
    %v98 = vld [vmem:[%s7] sm:$0xff]
    %v99 = vpack.c.bf16 %v77, %v76
    %v100 = vlaneseq
    %v101 = vshrl.u32 %v100, 7
    %v102 = vsub.s32 0, %v101
    %v103 = vrot.slane %v98, %v102
    %v108 = vunpack.c.l.b16 %v78
    %v109 = vunpack.c.l.b16 %v79
    %v110 = vunpack.c.l.b16 %v80
    %v111 = vunpack.c.l.b16 %v81
    %v112 = vpack.c.b16 %v109, %v108
    %v113 = vpack.c.b16 %v111, %v110
    %v117 = vsel %vm38, %v99, 0
    %119 = vmatprep.subr.bf16.mxu0 0
    %120 = vmatpush1.bf16.msra.mxu0 %v112
    %121 = vmatprep.subr.bf16.mxu0 0
    %122 = vmatpush1.bf16.msra.mxu0 %v113
    %123 = vmatprep.subr.bf16.mxu0 0
    %124 = vmatpush1.bf16.msra.mxu0 0
    %125 = vmatprep.subr.bf16.mxu0 0
    %126 = vmatpush1.bf16.msra.mxu0 0
    %127 = vmatprep.subr.bf16.mxu0 0
    %128 = vmatpush1.bf16.msra.mxu0 0
    %129 = vmatprep.subr.bf16.mxu0 0
    %130 = vmatpush1.bf16.msra.mxu0 0
    %131 = vmatprep.subr.bf16.mxu0 0
    %132 = vmatpush1.bf16.msra.mxu0 0
    %133 = vmatprep.subr.bf16.mxu0 0
    %134 = vmatpush1.bf16.msra.mxu0 0
    %135 = vmatprep.subr.bf16.mxu0 0
    %136 = vmatpush1.bf16.msra.mxu0 0
    %137 = vmatprep.subr.bf16.mxu0 0
    %138 = vmatpush1.bf16.msra.mxu0 0
    %139 = vmatprep.subr.bf16.mxu0 0
    %140 = vmatpush1.bf16.msra.mxu0 0
    %141 = vmatprep.subr.bf16.mxu0 0
    %142 = vmatpush1.bf16.msra.mxu0 0
    %143 = vmatprep.subr.bf16.mxu0 0
    %144 = vmatpush1.bf16.msra.mxu0 0
    %145 = vmatprep.subr.bf16.mxu0 0
    %146 = vmatpush1.bf16.msra.mxu0 0
    %147 = vmatprep.subr.bf16.mxu0 0
    %148 = vmatpush1.bf16.msra.mxu0 0
    %149 = vmatprep.subr.bf16.mxu0 0
    %150 = vmatpush1.bf16.msra.mxu0 0
    %151 = vmatprep.mubr.bf16.mxu0 0
    %152 = vmatmul.mubr.bf16.gmra.mrb[0].mxu0 %v117
    %v153 = vpop.f32.mrb[0].mxu0
    %v154 = vadd.f32 %v103, %v153
    %v155 = vpop.f32.mrb[0].mxu0
    %v156 = vpop.f32.mrb[0].mxu0
    %v157 = vadd.f32 %v103, %v156
    %v158 = vpop.f32.mrb[0].mxu0
    %159 = vdwg.mxu0
    %v160 = vpack.c.bf16 %v154, %v154
    %162 = vrot.lane.b32.xlu0 %v160, 96
    %v163 = vpop.permute.xlu0 %162
    %vm164 = vcmask 130048
    %v166 = vsel %vm164, %v160, 0
    %v169 = vsel %vm164, %v163, 0
    %171 = vmatprep.subr.bf16.mxu0 0
    %172 = vmatpush1.bf16.xpose.msra.mxu0 %v169
    %173 = vmatprep.subr.bf16.mxu0 0
    %174 = vmatpush1.bf16.xpose.msra.mxu0 0
    %175 = vmatprep.subr.bf16.mxu0 0
    %176 = vmatpush1.bf16.xpose.msra.mxu0 0
    %177 = vmatprep.subr.bf16.mxu0 0
    %178 = vmatpush1.bf16.xpose.msra.mxu0 0
    %179 = vmatprep.subr.bf16.mxu0 0
    %180 = vmatpush1.bf16.xpose.msra.mxu0 0
    %181 = vmatprep.subr.bf16.mxu0 0
    %182 = vmatpush1.bf16.xpose.msra.mxu0 0
    %183 = vmatprep.subr.bf16.mxu0 0
    %184 = vmatpush1.bf16.xpose.msra.mxu0 0
    %185 = vmatprep.subr.bf16.mxu0 0
    %186 = vmatpush1.bf16.xpose.msra.mxu0 0
    %187 = vmatprep.subr.bf16.mxu0 0
    %188 = vmatpush1.bf16.xpose.msra.mxu0 0
    %189 = vmatprep.subr.bf16.mxu0 0
    %190 = vmatpush1.bf16.xpose.msra.mxu0 0
    %191 = vmatprep.subr.bf16.mxu0 0
    %192 = vmatpush1.bf16.xpose.msra.mxu0 0
    %193 = vmatprep.subr.bf16.mxu0 0
    %194 = vmatpush1.bf16.xpose.msra.mxu0 0
    %195 = vmatprep.subr.bf16.mxu0 0
    %196 = vmatpush1.bf16.xpose.msra.mxu0 0
    %197 = vmatprep.subr.bf16.mxu0 0
    %198 = vmatpush1.bf16.xpose.msra.mxu0 0
    %199 = vmatprep.subr.bf16.mxu0 0
    %200 = vmatpush1.bf16.xpose.msra.mxu0 0
    %201 = vmatprep.subr.bf16.mxu0 0
    %202 = vmatpush1.bf16.xpose.msra.mxu0 0
    %203 = vmatprep.mubr.bf16.mxu0 0
    %204 = vmatmul.mubr.bf16.gmra.mrb[0].mxu0 %v166
    %v205 = vpop.f32.mrb[0].mxu0
    %v206 = vadd.f32 0.0, %v205
    %v207 = vpop.f32.mrb[0].mxu0
    %v208 = vpop.f32.mrb[0].mxu0
    %v209 = vpop.f32.mrb[0].mxu0
    %210 = vdwg.mxu0
    %v211 = vmul.f32 %v206, 0.25
    %v212 = vlaneseq
    %v213 = vshrl.u32 %v212, 7
    %v214 = vsub.s32 0, %v213
    %v215 = vrot.slane %v36, %v214
    %v216 = vadd.f32 %v211, %v215
    %217 = vrot.lane.b32.xlu0 %v160, 112
    %v218 = vpop.permute.xlu0 %217
    %219 = vrot.lane.b32.xlu0 %v160, 80
    %v220 = vpop.permute.xlu0 %219
    %v222 = vsel %vm164, %v218, 0
    %v225 = vsel %vm164, %v220, 0
    %227 = vmatprep.subr.bf16.mxu0 0
    %228 = vmatpush1.bf16.xpose.msra.mxu0 %v225
    %229 = vmatprep.subr.bf16.mxu0 0
    %230 = vmatpush1.bf16.xpose.msra.mxu0 0
    %231 = vmatprep.subr.bf16.mxu0 0
    %232 = vmatpush1.bf16.xpose.msra.mxu0 0
    %233 = vmatprep.subr.bf16.mxu0 0
    %234 = vmatpush1.bf16.xpose.msra.mxu0 0
    %235 = vmatprep.subr.bf16.mxu0 0
    %236 = vmatpush1.bf16.xpose.msra.mxu0 0
    %237 = vmatprep.subr.bf16.mxu0 0
    %238 = vmatpush1.bf16.xpose.msra.mxu0 0
    %239 = vmatprep.subr.bf16.mxu0 0
    %240 = vmatpush1.bf16.xpose.msra.mxu0 0
    %241 = vmatprep.subr.bf16.mxu0 0
    %242 = vmatpush1.bf16.xpose.msra.mxu0 0
    %243 = vmatprep.subr.bf16.mxu0 0
    %244 = vmatpush1.bf16.xpose.msra.mxu0 0
    %245 = vmatprep.subr.bf16.mxu0 0
    %246 = vmatpush1.bf16.xpose.msra.mxu0 0
    %247 = vmatprep.subr.bf16.mxu0 0
    %248 = vmatpush1.bf16.xpose.msra.mxu0 0
    %249 = vmatprep.subr.bf16.mxu0 0
    %250 = vmatpush1.bf16.xpose.msra.mxu0 0
    %251 = vmatprep.subr.bf16.mxu0 0
    %252 = vmatpush1.bf16.xpose.msra.mxu0 0
    %253 = vmatprep.subr.bf16.mxu0 0
    %254 = vmatpush1.bf16.xpose.msra.mxu0 0
    %255 = vmatprep.subr.bf16.mxu0 0
    %256 = vmatpush1.bf16.xpose.msra.mxu0 0
    %257 = vmatprep.subr.bf16.mxu0 0
    %258 = vmatpush1.bf16.xpose.msra.mxu0 0
    %259 = vmatprep.mubr.bf16.mxu0 0
    %260 = vmatmul.mubr.bf16.gmra.mrb[0].mxu0 %v222
    %v261 = vpop.f32.mrb[0].mxu0
    %v262 = vadd.f32 0.0, %v261
    %v263 = vpop.f32.mrb[0].mxu0
    %v264 = vpop.f32.mrb[0].mxu0
    %v265 = vpop.f32.mrb[0].mxu0
    %266 = vdwg.mxu0
    %v267 = vmul.f32 %v262, 0.25
    %v268 = vadd.f32 %v267, %v215
    %v269 = vpack.c.bf16 %v157, %v157
    %271 = vrot.lane.b32.xlu0 %v269, 96
    %v272 = vpop.permute.xlu0 %271
    %v274 = vsel %vm164, %v269, 0
    %v277 = vsel %vm164, %v272, 0
    %279 = vmatprep.subr.bf16.mxu0 0
    %280 = vmatpush1.bf16.xpose.msra.mxu0 %v277
    %281 = vmatprep.subr.bf16.mxu0 0
    %282 = vmatpush1.bf16.xpose.msra.mxu0 0
    %283 = vmatprep.subr.bf16.mxu0 0
    %284 = vmatpush1.bf16.xpose.msra.mxu0 0
    %285 = vmatprep.subr.bf16.mxu0 0
    %286 = vmatpush1.bf16.xpose.msra.mxu0 0
    %287 = vmatprep.subr.bf16.mxu0 0
    %288 = vmatpush1.bf16.xpose.msra.mxu0 0
    %289 = vmatprep.subr.bf16.mxu0 0
    %290 = vmatpush1.bf16.xpose.msra.mxu0 0
    %291 = vmatprep.subr.bf16.mxu0 0
    %292 = vmatpush1.bf16.xpose.msra.mxu0 0
    %293 = vmatprep.subr.bf16.mxu0 0
    %294 = vmatpush1.bf16.xpose.msra.mxu0 0
    %295 = vmatprep.subr.bf16.mxu0 0
    %296 = vmatpush1.bf16.xpose.msra.mxu0 0
    %297 = vmatprep.subr.bf16.mxu0 0
    %298 = vmatpush1.bf16.xpose.msra.mxu0 0
    %299 = vmatprep.subr.bf16.mxu0 0
    %300 = vmatpush1.bf16.xpose.msra.mxu0 0
    %301 = vmatprep.subr.bf16.mxu0 0
    %302 = vmatpush1.bf16.xpose.msra.mxu0 0
    %303 = vmatprep.subr.bf16.mxu0 0
    %304 = vmatpush1.bf16.xpose.msra.mxu0 0
    %305 = vmatprep.subr.bf16.mxu0 0
    %306 = vmatpush1.bf16.xpose.msra.mxu0 0
    %307 = vmatprep.subr.bf16.mxu0 0
    %308 = vmatpush1.bf16.xpose.msra.mxu0 0
    %309 = vmatprep.subr.bf16.mxu0 0
    %310 = vmatpush1.bf16.xpose.msra.mxu0 0
    %311 = vmatprep.mubr.bf16.mxu0 0
    %312 = vmatmul.mubr.bf16.gmra.mrb[0].mxu0 %v274
    %v313 = vpop.f32.mrb[0].mxu0
    %v314 = vadd.f32 0.0, %v313
    %v315 = vpop.f32.mrb[0].mxu0
    %v316 = vpop.f32.mrb[0].mxu0
    %v317 = vpop.f32.mrb[0].mxu0
    %318 = vdwg.mxu0
    %v319 = vmul.f32 %v314, 0.25
    %v320 = vlaneseq
    %v321 = vshrl.u32 %v320, 7
    %v322 = vsub.s32 1, %v321
    %v323 = vrot.slane %v36, %v322
    %v324 = vadd.f32 %v319, %v323
    %325 = vrot.lane.b32.xlu0 %v269, 112
    %v326 = vpop.permute.xlu0 %325
    %327 = vrot.lane.b32.xlu0 %v269, 80
    %v328 = vpop.permute.xlu0 %327
    %v330 = vsel %vm164, %v326, 0
    %v333 = vsel %vm164, %v328, 0
    %335 = vmatprep.subr.bf16.mxu0 0
    %336 = vmatpush1.bf16.xpose.msra.mxu0 %v333
    %337 = vmatprep.subr.bf16.mxu0 0
    %338 = vmatpush1.bf16.xpose.msra.mxu0 0
    %339 = vmatprep.subr.bf16.mxu0 0
    %340 = vmatpush1.bf16.xpose.msra.mxu0 0
    %341 = vmatprep.subr.bf16.mxu0 0
    %342 = vmatpush1.bf16.xpose.msra.mxu0 0
    %343 = vmatprep.subr.bf16.mxu0 0
    %344 = vmatpush1.bf16.xpose.msra.mxu0 0
    %345 = vmatprep.subr.bf16.mxu0 0
    %346 = vmatpush1.bf16.xpose.msra.mxu0 0
    %347 = vmatprep.subr.bf16.mxu0 0
    %348 = vmatpush1.bf16.xpose.msra.mxu0 0
    %349 = vmatprep.subr.bf16.mxu0 0
    %350 = vmatpush1.bf16.xpose.msra.mxu0 0
    %351 = vmatprep.subr.bf16.mxu0 0
    %352 = vmatpush1.bf16.xpose.msra.mxu0 0
    %353 = vmatprep.subr.bf16.mxu0 0
    %354 = vmatpush1.bf16.xpose.msra.mxu0 0
    %355 = vmatprep.subr.bf16.mxu0 0
    %356 = vmatpush1.bf16.xpose.msra.mxu0 0
    %357 = vmatprep.subr.bf16.mxu0 0
    %358 = vmatpush1.bf16.xpose.msra.mxu0 0
    %359 = vmatprep.subr.bf16.mxu0 0
    %360 = vmatpush1.bf16.xpose.msra.mxu0 0
    %361 = vmatprep.subr.bf16.mxu0 0
    %362 = vmatpush1.bf16.xpose.msra.mxu0 0
    %363 = vmatprep.subr.bf16.mxu0 0
    %364 = vmatpush1.bf16.xpose.msra.mxu0 0
    %365 = vmatprep.subr.bf16.mxu0 0
    %366 = vmatpush1.bf16.xpose.msra.mxu0 0
    %367 = vmatprep.mubr.bf16.mxu0 0
    %368 = vmatmul.mubr.bf16.gmra.mrb[0].mxu0 %v330
    %v369 = vpop.f32.mrb[0].mxu0
    %v370 = vadd.f32 0.0, %v369
    %v371 = vpop.f32.mrb[0].mxu0
    %v372 = vpop.f32.mrb[0].mxu0
    %v373 = vpop.f32.mrb[0].mxu0
    %374 = vdwg.mxu0
    %v375 = vmul.f32 %v370, 0.25
    %v376 = vadd.f32 %v375, %v323
    %vm377 = vcmask 64512
    %v378 = vsel %vm377, %v216, -inf
    %379 = vmax.xlane.f32.xlu0 %v378
    %v380 = vpop.xlane.xlu0 %379
    %v381 = vsel %vm377, %v268, -inf
    %382 = vmax.xlane.f32.xlu0 %v381
    %v383 = vpop.xlane.xlu0 %382
    %v384 = vsel %vm377, %v324, -inf
    %385 = vmax.xlane.f32.xlu0 %v384
    %v386 = vpop.xlane.xlu0 %385
    %v387 = vsel %vm377, %v376, -inf
    %388 = vmax.xlane.f32.xlu0 %v387
    %v389 = vpop.xlane.xlu0 %388
    %v390 = vsub.f32 %v216, %v380
    %v391 = vsub.f32 %v268, %v383
    %v392 = vsub.f32 %v324, %v386
    %v393 = vsub.f32 %v376, %v389
    %v394 = vmul.f32 %v390, 1.442695
    %v395 = vpow.pop %v394
    %v396 = vmul.f32 %v391, 1.442695
    %v397 = vpow.pop %v396
    %v398 = vmul.f32 %v392, 1.442695
    %v399 = vpow.pop %v398
    %v400 = vmul.f32 %v393, 1.442695
    %v401 = vpow.pop %v400
    %v402 = vsel %vm377, %v395, 0.0
    %403 = vadd.xlane.f32.xlu0 %v402
    %v404 = vpop.xlane.xlu0 %403
    %v405 = vsel %vm377, %v397, 0.0
    %406 = vadd.xlane.f32.xlu0 %v405
    %v407 = vpop.xlane.xlu0 %406
    %v408 = vsel %vm377, %v399, 0.0
    %409 = vadd.xlane.f32.xlu0 %v408
    %v410 = vpop.xlane.xlu0 %409
    %v411 = vsel %vm377, %v401, 0.0
    %412 = vadd.xlane.f32.xlu0 %v411
    %v413 = vpop.xlane.xlu0 %412
    %v414 = vrcp.pop %v404
    %v415 = vrcp.pop %v407
    %v416 = vrcp.pop %v410
    %v417 = vrcp.pop %v413
    %v418 = vmul.f32 %v395, %v414
    %v419 = vmul.f32 %v397, %v415
    %v420 = vmul.f32 %v399, %v416
    %v421 = vmul.f32 %v401, %v417
    %v422 = vpack.c.bf16 %v418, %v418
    %423 = vrot.lane.b32.xlu0 %v160, 64
    %v424 = vpop.permute.xlu0 %423
    %v426 = vsel %vm377, %v422, 0
    %vm428 = vcmask 1043456
    %v430 = vsel %vm428, %v424, 0
    %432 = vmatprep.subr.bf16.mxu0 0
    %433 = vmatpush1.bf16.msra.mxu0 %v430
    %434 = vmatprep.subr.bf16.mxu0 0
    %435 = vmatpush1.bf16.msra.mxu0 0
    %436 = vmatprep.subr.bf16.mxu0 0
    %437 = vmatpush1.bf16.msra.mxu0 0
    %438 = vmatprep.subr.bf16.mxu0 0
    %439 = vmatpush1.bf16.msra.mxu0 0
    %440 = vmatprep.subr.bf16.mxu0 0
    %441 = vmatpush1.bf16.msra.mxu0 0
    %442 = vmatprep.subr.bf16.mxu0 0
    %443 = vmatpush1.bf16.msra.mxu0 0
    %444 = vmatprep.subr.bf16.mxu0 0
    %445 = vmatpush1.bf16.msra.mxu0 0
    %446 = vmatprep.subr.bf16.mxu0 0
    %447 = vmatpush1.bf16.msra.mxu0 0
    %448 = vmatprep.subr.bf16.mxu0 0
    %449 = vmatpush1.bf16.msra.mxu0 0
    %450 = vmatprep.subr.bf16.mxu0 0
    %451 = vmatpush1.bf16.msra.mxu0 0
    %452 = vmatprep.subr.bf16.mxu0 0
    %453 = vmatpush1.bf16.msra.mxu0 0
    %454 = vmatprep.subr.bf16.mxu0 0
    %455 = vmatpush1.bf16.msra.mxu0 0
    %456 = vmatprep.subr.bf16.mxu0 0
    %457 = vmatpush1.bf16.msra.mxu0 0
    %458 = vmatprep.subr.bf16.mxu0 0
    %459 = vmatpush1.bf16.msra.mxu0 0
    %460 = vmatprep.subr.bf16.mxu0 0
    %461 = vmatpush1.bf16.msra.mxu0 0
    %462 = vmatprep.subr.bf16.mxu0 0
    %463 = vmatpush1.bf16.msra.mxu0 0
    %464 = vmatprep.mubr.bf16.mxu0 0
    %465 = vmatmul.mubr.bf16.gmra.mrb[0].mxu0 %v426
    %v466 = vpop.f32.mrb[0].mxu0
    %v467 = vadd.f32 0.0, %v466
    %v468 = vpop.f32.mrb[0].mxu0
    %v469 = vpop.f32.mrb[0].mxu0
    %v470 = vpop.f32.mrb[0].mxu0
    %471 = vdwg.mxu0
    %v472 = vpack.c.bf16 %v419, %v419
    %473 = vrot.lane.b32.xlu0 %v160, 48
    %v474 = vpop.permute.xlu0 %473
    %v476 = vsel %vm377, %v472, 0
    %v479 = vsel %vm428, %v474, 0
    %481 = vmatprep.subr.bf16.mxu0 0
    %482 = vmatpush1.bf16.msra.mxu0 %v479
    %483 = vmatprep.subr.bf16.mxu0 0
    %484 = vmatpush1.bf16.msra.mxu0 0
    %485 = vmatprep.subr.bf16.mxu0 0
    %486 = vmatpush1.bf16.msra.mxu0 0
    %487 = vmatprep.subr.bf16.mxu0 0
    %488 = vmatpush1.bf16.msra.mxu0 0
    %489 = vmatprep.subr.bf16.mxu0 0
    %490 = vmatpush1.bf16.msra.mxu0 0
    %491 = vmatprep.subr.bf16.mxu0 0
    %492 = vmatpush1.bf16.msra.mxu0 0
    %493 = vmatprep.subr.bf16.mxu0 0
    %494 = vmatpush1.bf16.msra.mxu0 0
    %495 = vmatprep.subr.bf16.mxu0 0
    %496 = vmatpush1.bf16.msra.mxu0 0
    %497 = vmatprep.subr.bf16.mxu0 0
    %498 = vmatpush1.bf16.msra.mxu0 0
    %499 = vmatprep.subr.bf16.mxu0 0
    %500 = vmatpush1.bf16.msra.mxu0 0
    %501 = vmatprep.subr.bf16.mxu0 0
    %502 = vmatpush1.bf16.msra.mxu0 0
    %503 = vmatprep.subr.bf16.mxu0 0
    %504 = vmatpush1.bf16.msra.mxu0 0
    %505 = vmatprep.subr.bf16.mxu0 0
    %506 = vmatpush1.bf16.msra.mxu0 0
    %507 = vmatprep.subr.bf16.mxu0 0
    %508 = vmatpush1.bf16.msra.mxu0 0
    %509 = vmatprep.subr.bf16.mxu0 0
    %510 = vmatpush1.bf16.msra.mxu0 0
    %511 = vmatprep.subr.bf16.mxu0 0
    %512 = vmatpush1.bf16.msra.mxu0 0
    %513 = vmatprep.mubr.bf16.mxu0 0
    %514 = vmatmul.mubr.bf16.gmra.mrb[0].mxu0 %v476
    %v515 = vpop.f32.mrb[0].mxu0
    %v516 = vadd.f32 0.0, %v515
    %v517 = vpop.f32.mrb[0].mxu0
    %v518 = vpop.f32.mrb[0].mxu0
    %v519 = vpop.f32.mrb[0].mxu0
    %520 = vdwg.mxu0
    %522 = vrot.lane.b32.xlu0 %v516, 16
    %v523 = vpop.permute.xlu0 %522
    %v525 = vsel %vm164, %v467, %v523
    %v526 = vpack.c.bf16 %v420, %v420
    %527 = vrot.lane.b32.xlu0 %v269, 64
    %v528 = vpop.permute.xlu0 %527
    %v530 = vsel %vm377, %v526, 0
    %v533 = vsel %vm428, %v528, 0
    %535 = vmatprep.subr.bf16.mxu0 0
    %536 = vmatpush1.bf16.msra.mxu0 %v533
    %537 = vmatprep.subr.bf16.mxu0 0
    %538 = vmatpush1.bf16.msra.mxu0 0
    %539 = vmatprep.subr.bf16.mxu0 0
    %540 = vmatpush1.bf16.msra.mxu0 0
    %541 = vmatprep.subr.bf16.mxu0 0
    %542 = vmatpush1.bf16.msra.mxu0 0
    %543 = vmatprep.subr.bf16.mxu0 0
    %544 = vmatpush1.bf16.msra.mxu0 0
    %545 = vmatprep.subr.bf16.mxu0 0
    %546 = vmatpush1.bf16.msra.mxu0 0
    %547 = vmatprep.subr.bf16.mxu0 0
    %548 = vmatpush1.bf16.msra.mxu0 0
    %549 = vmatprep.subr.bf16.mxu0 0
    %550 = vmatpush1.bf16.msra.mxu0 0
    %551 = vmatprep.subr.bf16.mxu0 0
    %552 = vmatpush1.bf16.msra.mxu0 0
    %553 = vmatprep.subr.bf16.mxu0 0
    %554 = vmatpush1.bf16.msra.mxu0 0
    %555 = vmatprep.subr.bf16.mxu0 0
    %556 = vmatpush1.bf16.msra.mxu0 0
    %557 = vmatprep.subr.bf16.mxu0 0
    %558 = vmatpush1.bf16.msra.mxu0 0
    %559 = vmatprep.subr.bf16.mxu0 0
    %560 = vmatpush1.bf16.msra.mxu0 0
    %561 = vmatprep.subr.bf16.mxu0 0
    %562 = vmatpush1.bf16.msra.mxu0 0
    %563 = vmatprep.subr.bf16.mxu0 0
    %564 = vmatpush1.bf16.msra.mxu0 0
    %565 = vmatprep.subr.bf16.mxu0 0
    %566 = vmatpush1.bf16.msra.mxu0 0
    %567 = vmatprep.mubr.bf16.mxu0 0
    %568 = vmatmul.mubr.bf16.gmra.mrb[0].mxu0 %v530
    %v569 = vpop.f32.mrb[0].mxu0
    %v570 = vadd.f32 0.0, %v569
    %v571 = vpop.f32.mrb[0].mxu0
    %v572 = vpop.f32.mrb[0].mxu0
    %v573 = vpop.f32.mrb[0].mxu0
    %574 = vdwg.mxu0
    %v575 = vpack.c.bf16 %v421, %v421
    %576 = vrot.lane.b32.xlu0 %v269, 48
    %v577 = vpop.permute.xlu0 %576
    %v579 = vsel %vm377, %v575, 0
    %v582 = vsel %vm428, %v577, 0
    %584 = vmatprep.subr.bf16.mxu0 0
    %585 = vmatpush1.bf16.msra.mxu0 %v582
    %586 = vmatprep.subr.bf16.mxu0 0
    %587 = vmatpush1.bf16.msra.mxu0 0
    %588 = vmatprep.subr.bf16.mxu0 0
    %589 = vmatpush1.bf16.msra.mxu0 0
    %590 = vmatprep.subr.bf16.mxu0 0
    %591 = vmatpush1.bf16.msra.mxu0 0
    %592 = vmatprep.subr.bf16.mxu0 0
    %593 = vmatpush1.bf16.msra.mxu0 0
    %594 = vmatprep.subr.bf16.mxu0 0
    %595 = vmatpush1.bf16.msra.mxu0 0
    %596 = vmatprep.subr.bf16.mxu0 0
    %597 = vmatpush1.bf16.msra.mxu0 0
    %598 = vmatprep.subr.bf16.mxu0 0
    %599 = vmatpush1.bf16.msra.mxu0 0
    %600 = vmatprep.subr.bf16.mxu0 0
    %601 = vmatpush1.bf16.msra.mxu0 0
    %602 = vmatprep.subr.bf16.mxu0 0
    %603 = vmatpush1.bf16.msra.mxu0 0
    %604 = vmatprep.subr.bf16.mxu0 0
    %605 = vmatpush1.bf16.msra.mxu0 0
    %606 = vmatprep.subr.bf16.mxu0 0
    %607 = vmatpush1.bf16.msra.mxu0 0
    %608 = vmatprep.subr.bf16.mxu0 0
    %609 = vmatpush1.bf16.msra.mxu0 0
    %610 = vmatprep.subr.bf16.mxu0 0
    %611 = vmatpush1.bf16.msra.mxu0 0
    %612 = vmatprep.subr.bf16.mxu0 0
    %613 = vmatpush1.bf16.msra.mxu0 0
    %614 = vmatprep.subr.bf16.mxu0 0
    %615 = vmatpush1.bf16.msra.mxu0 0
    %616 = vmatprep.mubr.bf16.mxu0 0
    %617 = vmatmul.mubr.bf16.gmra.mrb[0].mxu0 %v579
    %v618 = vpop.f32.mrb[0].mxu0
    %v619 = vadd.f32 0.0, %v618
    %v620 = vpop.f32.mrb[0].mxu0
    %v621 = vpop.f32.mrb[0].mxu0
    %v622 = vpop.f32.mrb[0].mxu0
    %623 = vdwg.mxu0
    %625 = vrot.lane.b32.xlu0 %v619, 16
    %v626 = vpop.permute.xlu0 %625
    %v628 = vsel %vm164, %v570, %v626
    %v629 = vpack.c.bf16 %v628, %v525
    %v630 = vlaneseq
    %v631 = vshrl.u32 %v630, 7
    %v632 = vsub.s32 2, %v631
    %v633 = vrot.slane %v98, %v632
    %v638 = vunpack.c.l.b16 %v82
    %v639 = vunpack.c.l.b16 %v83
    %v640 = vunpack.c.l.b16 %v84
    %v641 = vunpack.c.l.b16 %v85
    %v642 = vpack.c.b16 %v639, %v638
    %v643 = vpack.c.b16 %v641, %v640
    %v647 = vsel %vm38, %v629, 0
    %649 = vmatprep.subr.bf16.mxu0 0
    %650 = vmatpush1.bf16.msra.mxu0 %v642
    %651 = vmatprep.subr.bf16.mxu0 0
    %652 = vmatpush1.bf16.msra.mxu0 %v643
    %653 = vmatprep.subr.bf16.mxu0 0
    %654 = vmatpush1.bf16.msra.mxu0 0
    %655 = vmatprep.subr.bf16.mxu0 0
    %656 = vmatpush1.bf16.msra.mxu0 0
    %657 = vmatprep.subr.bf16.mxu0 0
    %658 = vmatpush1.bf16.msra.mxu0 0
    %659 = vmatprep.subr.bf16.mxu0 0
    %660 = vmatpush1.bf16.msra.mxu0 0
    %661 = vmatprep.subr.bf16.mxu0 0
    %662 = vmatpush1.bf16.msra.mxu0 0
    %663 = vmatprep.subr.bf16.mxu0 0
    %664 = vmatpush1.bf16.msra.mxu0 0
    %665 = vmatprep.subr.bf16.mxu0 0
    %666 = vmatpush1.bf16.msra.mxu0 0
    %667 = vmatprep.subr.bf16.mxu0 0
    %668 = vmatpush1.bf16.msra.mxu0 0
    %669 = vmatprep.subr.bf16.mxu0 0
    %670 = vmatpush1.bf16.msra.mxu0 0
    %671 = vmatprep.subr.bf16.mxu0 0
    %672 = vmatpush1.bf16.msra.mxu0 0
    %673 = vmatprep.subr.bf16.mxu0 0
    %674 = vmatpush1.bf16.msra.mxu0 0
    %675 = vmatprep.subr.bf16.mxu0 0
    %676 = vmatpush1.bf16.msra.mxu0 0
    %677 = vmatprep.subr.bf16.mxu0 0
    %678 = vmatpush1.bf16.msra.mxu0 0
    %679 = vmatprep.subr.bf16.mxu0 0
    %680 = vmatpush1.bf16.msra.mxu0 0
    %681 = vmatprep.mubr.bf16.mxu0 0
    %682 = vmatmul.mubr.bf16.gmra.mrb[0].mxu0 %v647
    %v683 = vpop.f32.mrb[0].mxu0
    %v684 = vadd.f32 %v633, %v683
    %v685 = vpop.f32.mrb[0].mxu0
    %v686 = vpop.f32.mrb[0].mxu0
    %v687 = vadd.f32 %v633, %v686
    %v688 = vpop.f32.mrb[0].mxu0
    %689 = vdwg.mxu0
    %v690 = vadd.f32 %v684, %v76
    %v691 = vadd.f32 %v687, %v77
    %v692 = vsel %vm38, %v690, 0.0
    %693 = vadd.xlane.f32.xlu0 %v692
    %v694 = vpop.xlane.xlu0 %693
    %v695 = vsel %vm38, %v691, 0.0
    %696 = vadd.xlane.f32.xlu0 %v695
    %v697 = vpop.xlane.xlu0 %696
    %v698 = vmul.f32 %v694, %v45
    %v699 = vmul.f32 %v697, %v45
    %v700 = vsub.f32 %v690, %v698
    %v701 = vsub.f32 %v691, %v699
    %v702 = vmul.f32 %v700, %v700
    %v703 = vmul.f32 %v701, %v701
    %v704 = vsel %vm38, %v702, 0.0
    %705 = vadd.xlane.f32.xlu0 %v704
    %v706 = vpop.xlane.xlu0 %705
    %v707 = vsel %vm38, %v703, 0.0
    %708 = vadd.xlane.f32.xlu0 %v707
    %v709 = vpop.xlane.xlu0 %708
    %v710 = vmul.f32 %v706, %v45
    %v711 = vmul.f32 %v709, %v45
    %v712 = vadd.f32 %v710, 1e-12
    %v713 = vadd.f32 %v711, 1e-12
    %v714 = vrsqrt.pop %v712
    %v715 = vrsqrt.pop %v713
    %v716 = vmul.f32 %v700, %v714
    %v717 = vmul.f32 %v701, %v715
    %v718 = vlaneseq
    %v719 = vshrl.u32 %v718, 7
    %v720 = vsub.s32 4, %v719
    %v721 = vrot.slane %v98, %v720
    %v722 = vmul.f32 %v716, %v721
    %v723 = vmul.f32 %v717, %v721
    %v724 = vlaneseq
    %v725 = vshrl.u32 %v724, 7
    %v726 = vsub.s32 5, %v725
    %v727 = vrot.slane %v98, %v726
    %v728 = vadd.f32 %v722, %v727
    %v729 = vadd.f32 %v723, %v727
    %v730 = vpack.c.bf16 %v729, %v728
    %v731 = vlaneseq
    %v732 = vshrl.u32 %v731, 7
    %v733 = vsub.s32 1, %v732
    %v734 = vrot.slane %v98, %v733
    %v739 = vunpack.c.l.b16 %v86
    %v740 = vunpack.c.l.b16 %v87
    %v741 = vunpack.c.l.b16 %v88
    %v742 = vunpack.c.l.b16 %v89
    %v743 = vpack.c.b16 %v740, %v739
    %v744 = vpack.c.b16 %v742, %v741
    %v748 = vsel %vm38, %v730, 0
    %750 = vmatprep.subr.bf16.mxu0 0
    %751 = vmatpush1.bf16.msra.mxu0 %v743
    %752 = vmatprep.subr.bf16.mxu0 0
    %753 = vmatpush1.bf16.msra.mxu0 %v744
    %754 = vmatprep.subr.bf16.mxu0 0
    %755 = vmatpush1.bf16.msra.mxu0 0
    %756 = vmatprep.subr.bf16.mxu0 0
    %757 = vmatpush1.bf16.msra.mxu0 0
    %758 = vmatprep.subr.bf16.mxu0 0
    %759 = vmatpush1.bf16.msra.mxu0 0
    %760 = vmatprep.subr.bf16.mxu0 0
    %761 = vmatpush1.bf16.msra.mxu0 0
    %762 = vmatprep.subr.bf16.mxu0 0
    %763 = vmatpush1.bf16.msra.mxu0 0
    %764 = vmatprep.subr.bf16.mxu0 0
    %765 = vmatpush1.bf16.msra.mxu0 0
    %766 = vmatprep.subr.bf16.mxu0 0
    %767 = vmatpush1.bf16.msra.mxu0 0
    %768 = vmatprep.subr.bf16.mxu0 0
    %769 = vmatpush1.bf16.msra.mxu0 0
    %770 = vmatprep.subr.bf16.mxu0 0
    %771 = vmatpush1.bf16.msra.mxu0 0
    %772 = vmatprep.subr.bf16.mxu0 0
    %773 = vmatpush1.bf16.msra.mxu0 0
    %774 = vmatprep.subr.bf16.mxu0 0
    %775 = vmatpush1.bf16.msra.mxu0 0
    %776 = vmatprep.subr.bf16.mxu0 0
    %777 = vmatpush1.bf16.msra.mxu0 0
    %778 = vmatprep.subr.bf16.mxu0 0
    %779 = vmatpush1.bf16.msra.mxu0 0
    %780 = vmatprep.subr.bf16.mxu0 0
    %781 = vmatpush1.bf16.msra.mxu0 0
    %782 = vmatprep.mubr.bf16.mxu0 0
    %783 = vmatmul.mubr.bf16.gmra.mrb[0].mxu0 %v748
    %v784 = vpop.f32.mrb[0].mxu0
    %v785 = vadd.f32 %v734, %v784
    %v786 = vpop.f32.mrb[0].mxu0
    %v787 = vpop.f32.mrb[0].mxu0
    %v788 = vadd.f32 %v734, %v787
    %v789 = vpop.f32.mrb[0].mxu0
    %790 = vdwg.mxu0
    %v791 = vmul.f32 %v785, %v785
    %v792 = vmul.f32 %v788, %v788
    %v793 = vmul.f32 %v785, %v791
    %v794 = vmul.f32 %v788, %v792
    %v795 = vmul.f32 %v793, 0.044715
    %v796 = vmul.f32 %v794, 0.044715
    %v797 = vadd.f32 %v785, %v795
    %v798 = vadd.f32 %v788, %v796
    %v799 = vmul.f32 %v797, 0.7978846
    %v800 = vmul.f32 %v798, 0.7978846
    %v801 = vtanh.pop %v799
    %v802 = vtanh.pop %v800
    %v803 = vadd.f32 %v801, 1.0
    %v804 = vadd.f32 %v802, 1.0
    %v805 = vmul.f32 %v803, 0.5
    %v806 = vmul.f32 %v804, 0.5
    %v807 = vmul.f32 %v785, %v805
    %v808 = vmul.f32 %v788, %v806
    %v809 = vpack.c.bf16 %v808, %v807
    %v810 = vlaneseq
    %v811 = vshrl.u32 %v810, 7
    %v812 = vsub.s32 3, %v811
    %v813 = vrot.slane %v98, %v812
    %v822 = vunpack.c.l.b16 %v90
    %v823 = vunpack.c.l.b16 %v91
    %v824 = vunpack.c.l.b16 %v92
    %v825 = vunpack.c.l.b16 %v93
    %v826 = vunpack.c.l.b16 %v94
    %v827 = vunpack.c.l.b16 %v95
    %v828 = vunpack.c.l.b16 %v96
    %v829 = vunpack.c.l.b16 %v97
    %v830 = vpack.c.b16 %v823, %v822
    %v831 = vpack.c.b16 %v825, %v824
    %v832 = vpack.c.b16 %v827, %v826
    %v833 = vpack.c.b16 %v829, %v828
    %vm838 = vcmask 523264
    %v840 = vsel %vm838, %v809, 0
    %842 = vmatprep.subr.bf16.mxu0 0
    %843 = vmatpush1.bf16.msra.mxu0 %v830
    %844 = vmatprep.subr.bf16.mxu0 0
    %845 = vmatpush1.bf16.msra.mxu0 %v831
    %846 = vmatprep.subr.bf16.mxu0 0
    %847 = vmatpush1.bf16.msra.mxu0 %v832
    %848 = vmatprep.subr.bf16.mxu0 0
    %849 = vmatpush1.bf16.msra.mxu0 %v833
    %850 = vmatprep.subr.bf16.mxu0 0
    %851 = vmatpush1.bf16.msra.mxu0 0
    %852 = vmatprep.subr.bf16.mxu0 0
    %853 = vmatpush1.bf16.msra.mxu0 0
    %854 = vmatprep.subr.bf16.mxu0 0
    %855 = vmatpush1.bf16.msra.mxu0 0
    %856 = vmatprep.subr.bf16.mxu0 0
    %857 = vmatpush1.bf16.msra.mxu0 0
    %858 = vmatprep.subr.bf16.mxu0 0
    %859 = vmatpush1.bf16.msra.mxu0 0
    %860 = vmatprep.subr.bf16.mxu0 0
    %861 = vmatpush1.bf16.msra.mxu0 0
    %862 = vmatprep.subr.bf16.mxu0 0
    %863 = vmatpush1.bf16.msra.mxu0 0
    %864 = vmatprep.subr.bf16.mxu0 0
    %865 = vmatpush1.bf16.msra.mxu0 0
    %866 = vmatprep.subr.bf16.mxu0 0
    %867 = vmatpush1.bf16.msra.mxu0 0
    %868 = vmatprep.subr.bf16.mxu0 0
    %869 = vmatpush1.bf16.msra.mxu0 0
    %870 = vmatprep.subr.bf16.mxu0 0
    %871 = vmatpush1.bf16.msra.mxu0 0
    %872 = vmatprep.subr.bf16.mxu0 0
    %873 = vmatpush1.bf16.msra.mxu0 0
    %874 = vmatprep.mubr.bf16.mxu0 0
    %875 = vmatmul.mubr.bf16.gmra.mrb[0].mxu0 %v840
    %v876 = vpop.f32.mrb[0].mxu0
    %v877 = vadd.f32 %v813, %v876
    %v878 = vpop.f32.mrb[0].mxu0
    %v879 = vpop.f32.mrb[0].mxu0
    %v880 = vadd.f32 %v813, %v879
    %v881 = vpop.f32.mrb[0].mxu0
    %882 = vdwg.mxu0
    %v883 = vadd.f32 %v877, %v728
    %v884 = vadd.f32 %v880, %v729
    %v885 = vsel %vm38, %v883, 0.0
    %886 = vadd.xlane.f32.xlu0 %v885
    %v887 = vpop.xlane.xlu0 %886
    %v888 = vsel %vm38, %v884, 0.0
    %889 = vadd.xlane.f32.xlu0 %v888
    %v890 = vpop.xlane.xlu0 %889
    %v891 = vmul.f32 %v887, %v45
    %v892 = vmul.f32 %v890, %v45
    %v893 = vsub.f32 %v883, %v891
    %v894 = vsub.f32 %v884, %v892
    %v895 = vmul.f32 %v893, %v893
    %v896 = vmul.f32 %v894, %v894
    %v897 = vsel %vm38, %v895, 0.0
    %898 = vadd.xlane.f32.xlu0 %v897
    %v899 = vpop.xlane.xlu0 %898
    %v900 = vsel %vm38, %v896, 0.0
    %901 = vadd.xlane.f32.xlu0 %v900
    %v902 = vpop.xlane.xlu0 %901
    %v903 = vmul.f32 %v899, %v45
    %v904 = vmul.f32 %v902, %v45
    %v905 = vadd.f32 %v903, 1e-12
    %v906 = vadd.f32 %v904, 1e-12
    %v907 = vrsqrt.pop %v905
    %v908 = vrsqrt.pop %v906
    %v909 = vmul.f32 %v893, %v907
    %v910 = vmul.f32 %v894, %v908
    %v911 = vlaneseq
    %v912 = vshrl.u32 %v911, 7
    %v913 = vsub.s32 6, %v912
    %v914 = vrot.slane %v98, %v913
    %v915 = vmul.f32 %v909, %v914
    %v916 = vmul.f32 %v910, %v914
    %v917 = vlaneseq
    %v918 = vshrl.u32 %v917, 7
    %v919 = vsub.s32 7, %v918
    %v920 = vrot.slane %v98, %v919
    %v921 = vadd.f32 %v915, %v920
    %v922 = vadd.f32 %v916, %v920
    %s923 = scalar_lea.vmem %s3, 16
    %v924 = vld [vmem:[%s923] sm:$0xf]
    %v925 = vld [vmem:[%s923 + $0x4] sm:$0xf]
    %v926 = vld [vmem:[%s923 + $0x8] sm:$0xf]
    %v927 = vld [vmem:[%s923 + $0xc] sm:$0xf]
    %s928 = scalar_lea.vmem %s4, 16
    %v929 = vld [vmem:[%s928] sm:$0xf]
    %v930 = vld [vmem:[%s928 + $0x4] sm:$0xf]
    %v931 = vld [vmem:[%s928 + $0x8] sm:$0xf]
    %v932 = vld [vmem:[%s928 + $0xc] sm:$0xf]
    %s933 = scalar_lea.vmem %s5, 16
    %v934 = vld [vmem:[%s933] sm:$0xf]
    %v935 = vld [vmem:[%s933 + $0x4] sm:$0xf]
    %v936 = vld [vmem:[%s933 + $0x8] sm:$0xf]
    %v937 = vld [vmem:[%s933 + $0xc] sm:$0xf]
    %s938 = scalar_lea.vmem %s6, 32
    %v939 = vld [vmem:[%s938] sm:$0xf]
    %v940 = vld [vmem:[%s938 + $0x4] sm:$0xf]
    %v941 = vld [vmem:[%s938 + $0x8] sm:$0xf]
    %v942 = vld [vmem:[%s938 + $0xc] sm:$0xf]
    %v943 = vld [vmem:[%s938 + $0x10] sm:$0xf]
    %v944 = vld [vmem:[%s938 + $0x14] sm:$0xf]
    %v945 = vld [vmem:[%s938 + $0x18] sm:$0xf]
    %v946 = vld [vmem:[%s938 + $0x1c] sm:$0xf]
    %s947 = scalar_lea.vmem %s7, 8
    %v948 = vld [vmem:[%s947] sm:$0xff]
    %v949 = vpack.c.bf16 %v922, %v921
    %v950 = vlaneseq
    %v951 = vshrl.u32 %v950, 7
    %v952 = vsub.s32 0, %v951
    %v953 = vrot.slane %v948, %v952
    %v958 = vunpack.c.l.b16 %v924
    %v959 = vunpack.c.l.b16 %v925
    %v960 = vunpack.c.l.b16 %v926
    %v961 = vunpack.c.l.b16 %v927
    %v962 = vpack.c.b16 %v959, %v958
    %v963 = vpack.c.b16 %v961, %v960
    %v967 = vsel %vm38, %v949, 0
    %969 = vmatprep.subr.bf16.mxu0 0
    %970 = vmatpush1.bf16.msra.mxu0 %v962
    %971 = vmatprep.subr.bf16.mxu0 0
    %972 = vmatpush1.bf16.msra.mxu0 %v963
    %973 = vmatprep.subr.bf16.mxu0 0
    %974 = vmatpush1.bf16.msra.mxu0 0
    %975 = vmatprep.subr.bf16.mxu0 0
    %976 = vmatpush1.bf16.msra.mxu0 0
    %977 = vmatprep.subr.bf16.mxu0 0
    %978 = vmatpush1.bf16.msra.mxu0 0
    %979 = vmatprep.subr.bf16.mxu0 0
    %980 = vmatpush1.bf16.msra.mxu0 0
    %981 = vmatprep.subr.bf16.mxu0 0
    %982 = vmatpush1.bf16.msra.mxu0 0
    %983 = vmatprep.subr.bf16.mxu0 0
    %984 = vmatpush1.bf16.msra.mxu0 0
    %985 = vmatprep.subr.bf16.mxu0 0
    %986 = vmatpush1.bf16.msra.mxu0 0
    %987 = vmatprep.subr.bf16.mxu0 0
    %988 = vmatpush1.bf16.msra.mxu0 0
    %989 = vmatprep.subr.bf16.mxu0 0
    %990 = vmatpush1.bf16.msra.mxu0 0
    %991 = vmatprep.subr.bf16.mxu0 0
    %992 = vmatpush1.bf16.msra.mxu0 0
    %993 = vmatprep.subr.bf16.mxu0 0
    %994 = vmatpush1.bf16.msra.mxu0 0
    %995 = vmatprep.subr.bf16.mxu0 0
    %996 = vmatpush1.bf16.msra.mxu0 0
    %997 = vmatprep.subr.bf16.mxu0 0
    %998 = vmatpush1.bf16.msra.mxu0 0
    %999 = vmatprep.subr.bf16.mxu0 0
    %1000 = vmatpush1.bf16.msra.mxu0 0
    %1001 = vmatprep.mubr.bf16.mxu0 0
    %1002 = vmatmul.mubr.bf16.gmra.mrb[0].mxu0 %v967
    %v1003 = vpop.f32.mrb[0].mxu0
    %v1004 = vadd.f32 %v953, %v1003
    %v1005 = vpop.f32.mrb[0].mxu0
    %v1006 = vpop.f32.mrb[0].mxu0
    %v1007 = vadd.f32 %v953, %v1006
    %v1008 = vpop.f32.mrb[0].mxu0
    %1009 = vdwg.mxu0
    %v1010 = vpack.c.bf16 %v1004, %v1004
    %1012 = vrot.lane.b32.xlu0 %v1010, 96
    %v1013 = vpop.permute.xlu0 %1012
    %v1015 = vsel %vm164, %v1010, 0
    %v1018 = vsel %vm164, %v1013, 0
    %1020 = vmatprep.subr.bf16.mxu0 0
    %1021 = vmatpush1.bf16.xpose.msra.mxu0 %v1018
    %1022 = vmatprep.subr.bf16.mxu0 0
    %1023 = vmatpush1.bf16.xpose.msra.mxu0 0
    %1024 = vmatprep.subr.bf16.mxu0 0
    %1025 = vmatpush1.bf16.xpose.msra.mxu0 0
    %1026 = vmatprep.subr.bf16.mxu0 0
    %1027 = vmatpush1.bf16.xpose.msra.mxu0 0
    %1028 = vmatprep.subr.bf16.mxu0 0
    %1029 = vmatpush1.bf16.xpose.msra.mxu0 0
    %1030 = vmatprep.subr.bf16.mxu0 0
    %1031 = vmatpush1.bf16.xpose.msra.mxu0 0
    %1032 = vmatprep.subr.bf16.mxu0 0
    %1033 = vmatpush1.bf16.xpose.msra.mxu0 0
    %1034 = vmatprep.subr.bf16.mxu0 0
    %1035 = vmatpush1.bf16.xpose.msra.mxu0 0
    %1036 = vmatprep.subr.bf16.mxu0 0
    %1037 = vmatpush1.bf16.xpose.msra.mxu0 0
    %1038 = vmatprep.subr.bf16.mxu0 0
    %1039 = vmatpush1.bf16.xpose.msra.mxu0 0
    %1040 = vmatprep.subr.bf16.mxu0 0
    %1041 = vmatpush1.bf16.xpose.msra.mxu0 0
    %1042 = vmatprep.subr.bf16.mxu0 0
    %1043 = vmatpush1.bf16.xpose.msra.mxu0 0
    %1044 = vmatprep.subr.bf16.mxu0 0
    %1045 = vmatpush1.bf16.xpose.msra.mxu0 0
    %1046 = vmatprep.subr.bf16.mxu0 0
    %1047 = vmatpush1.bf16.xpose.msra.mxu0 0
    %1048 = vmatprep.subr.bf16.mxu0 0
    %1049 = vmatpush1.bf16.xpose.msra.mxu0 0
    %1050 = vmatprep.subr.bf16.mxu0 0
    %1051 = vmatpush1.bf16.xpose.msra.mxu0 0
    %1052 = vmatprep.mubr.bf16.mxu0 0
    %1053 = vmatmul.mubr.bf16.gmra.mrb[0].mxu0 %v1015
    %v1054 = vpop.f32.mrb[0].mxu0
    %v1055 = vadd.f32 0.0, %v1054
    %v1056 = vpop.f32.mrb[0].mxu0
    %v1057 = vpop.f32.mrb[0].mxu0
    %v1058 = vpop.f32.mrb[0].mxu0
    %1059 = vdwg.mxu0
    %v1060 = vmul.f32 %v1055, 0.25
    %v1061 = vadd.f32 %v1060, %v215
    %1062 = vrot.lane.b32.xlu0 %v1010, 112
    %v1063 = vpop.permute.xlu0 %1062
    %1064 = vrot.lane.b32.xlu0 %v1010, 80
    %v1065 = vpop.permute.xlu0 %1064
    %v1067 = vsel %vm164, %v1063, 0
    %v1070 = vsel %vm164, %v1065, 0
    %1072 = vmatprep.subr.bf16.mxu0 0
    %1073 = vmatpush1.bf16.xpose.msra.mxu0 %v1070
    %1074 = vmatprep.subr.bf16.mxu0 0
    %1075 = vmatpush1.bf16.xpose.msra.mxu0 0
    %1076 = vmatprep.subr.bf16.mxu0 0
    %1077 = vmatpush1.bf16.xpose.msra.mxu0 0
    %1078 = vmatprep.subr.bf16.mxu0 0
    %1079 = vmatpush1.bf16.xpose.msra.mxu0 0
    %1080 = vmatprep.subr.bf16.mxu0 0
    %1081 = vmatpush1.bf16.xpose.msra.mxu0 0
    %1082 = vmatprep.subr.bf16.mxu0 0
    %1083 = vmatpush1.bf16.xpose.msra.mxu0 0
    %1084 = vmatprep.subr.bf16.mxu0 0
    %1085 = vmatpush1.bf16.xpose.msra.mxu0 0
    %1086 = vmatprep.subr.bf16.mxu0 0
    %1087 = vmatpush1.bf16.xpose.msra.mxu0 0
    %1088 = vmatprep.subr.bf16.mxu0 0
    %1089 = vmatpush1.bf16.xpose.msra.mxu0 0
    %1090 = vmatprep.subr.bf16.mxu0 0
    %1091 = vmatpush1.bf16.xpose.msra.mxu0 0
    %1092 = vmatprep.subr.bf16.mxu0 0
    %1093 = vmatpush1.bf16.xpose.msra.mxu0 0
    %1094 = vmatprep.subr.bf16.mxu0 0
    %1095 = vmatpush1.bf16.xpose.msra.mxu0 0
    %1096 = vmatprep.subr.bf16.mxu0 0
    %1097 = vmatpush1.bf16.xpose.msra.mxu0 0
    %1098 = vmatprep.subr.bf16.mxu0 0
    %1099 = vmatpush1.bf16.xpose.msra.mxu0 0
    %1100 = vmatprep.subr.bf16.mxu0 0
    %1101 = vmatpush1.bf16.xpose.msra.mxu0 0
    %1102 = vmatprep.subr.bf16.mxu0 0
    %1103 = vmatpush1.bf16.xpose.msra.mxu0 0
    %1104 = vmatprep.mubr.bf16.mxu0 0
    %1105 = vmatmul.mubr.bf16.gmra.mrb[0].mxu0 %v1067
    %v1106 = vpop.f32.mrb[0].mxu0
    %v1107 = vadd.f32 0.0, %v1106
    %v1108 = vpop.f32.mrb[0].mxu0
    %v1109 = vpop.f32.mrb[0].mxu0
    %v1110 = vpop.f32.mrb[0].mxu0
    %1111 = vdwg.mxu0
    %v1112 = vmul.f32 %v1107, 0.25
    %v1113 = vadd.f32 %v1112, %v215
    %v1114 = vpack.c.bf16 %v1007, %v1007
    %1116 = vrot.lane.b32.xlu0 %v1114, 96
    %v1117 = vpop.permute.xlu0 %1116
    %v1119 = vsel %vm164, %v1114, 0
    %v1122 = vsel %vm164, %v1117, 0
    %1124 = vmatprep.subr.bf16.mxu0 0
    %1125 = vmatpush1.bf16.xpose.msra.mxu0 %v1122
    %1126 = vmatprep.subr.bf16.mxu0 0
    %1127 = vmatpush1.bf16.xpose.msra.mxu0 0
    %1128 = vmatprep.subr.bf16.mxu0 0
    %1129 = vmatpush1.bf16.xpose.msra.mxu0 0
    %1130 = vmatprep.subr.bf16.mxu0 0
    %1131 = vmatpush1.bf16.xpose.msra.mxu0 0
    %1132 = vmatprep.subr.bf16.mxu0 0
    %1133 = vmatpush1.bf16.xpose.msra.mxu0 0
    %1134 = vmatprep.subr.bf16.mxu0 0
    %1135 = vmatpush1.bf16.xpose.msra.mxu0 0
    %1136 = vmatprep.subr.bf16.mxu0 0
    %1137 = vmatpush1.bf16.xpose.msra.mxu0 0
    %1138 = vmatprep.subr.bf16.mxu0 0
    %1139 = vmatpush1.bf16.xpose.msra.mxu0 0
    %1140 = vmatprep.subr.bf16.mxu0 0
    %1141 = vmatpush1.bf16.xpose.msra.mxu0 0
    %1142 = vmatprep.subr.bf16.mxu0 0
    %1143 = vmatpush1.bf16.xpose.msra.mxu0 0
    %1144 = vmatprep.subr.bf16.mxu0 0
    %1145 = vmatpush1.bf16.xpose.msra.mxu0 0
    %1146 = vmatprep.subr.bf16.mxu0 0
    %1147 = vmatpush1.bf16.xpose.msra.mxu0 0
    %1148 = vmatprep.subr.bf16.mxu0 0
    %1149 = vmatpush1.bf16.xpose.msra.mxu0 0
    %1150 = vmatprep.subr.bf16.mxu0 0
    %1151 = vmatpush1.bf16.xpose.msra.mxu0 0
    %1152 = vmatprep.subr.bf16.mxu0 0
    %1153 = vmatpush1.bf16.xpose.msra.mxu0 0
    %1154 = vmatprep.subr.bf16.mxu0 0
    %1155 = vmatpush1.bf16.xpose.msra.mxu0 0
    %1156 = vmatprep.mubr.bf16.mxu0 0
    %1157 = vmatmul.mubr.bf16.gmra.mrb[0].mxu0 %v1119
    %v1158 = vpop.f32.mrb[0].mxu0
    %v1159 = vadd.f32 0.0, %v1158
    %v1160 = vpop.f32.mrb[0].mxu0
    %v1161 = vpop.f32.mrb[0].mxu0
    %v1162 = vpop.f32.mrb[0].mxu0
    %1163 = vdwg.mxu0
    %v1164 = vmul.f32 %v1159, 0.25
    %v1165 = vadd.f32 %v1164, %v323
    %1166 = vrot.lane.b32.xlu0 %v1114, 112
    %v1167 = vpop.permute.xlu0 %1166
    %1168 = vrot.lane.b32.xlu0 %v1114, 80
    %v1169 = vpop.permute.xlu0 %1168
    %v1171 = vsel %vm164, %v1167, 0
    %v1174 = vsel %vm164, %v1169, 0
    %1176 = vmatprep.subr.bf16.mxu0 0
    %1177 = vmatpush1.bf16.xpose.msra.mxu0 %v1174
    %1178 = vmatprep.subr.bf16.mxu0 0
    %1179 = vmatpush1.bf16.xpose.msra.mxu0 0
    %1180 = vmatprep.subr.bf16.mxu0 0
    %1181 = vmatpush1.bf16.xpose.msra.mxu0 0
    %1182 = vmatprep.subr.bf16.mxu0 0
    %1183 = vmatpush1.bf16.xpose.msra.mxu0 0
    %1184 = vmatprep.subr.bf16.mxu0 0
    %1185 = vmatpush1.bf16.xpose.msra.mxu0 0
    %1186 = vmatprep.subr.bf16.mxu0 0
    %1187 = vmatpush1.bf16.xpose.msra.mxu0 0
    %1188 = vmatprep.subr.bf16.mxu0 0
    %1189 = vmatpush1.bf16.xpose.msra.mxu0 0
    %1190 = vmatprep.subr.bf16.mxu0 0
    %1191 = vmatpush1.bf16.xpose.msra.mxu0 0
    %1192 = vmatprep.subr.bf16.mxu0 0
    %1193 = vmatpush1.bf16.xpose.msra.mxu0 0
    %1194 = vmatprep.subr.bf16.mxu0 0
    %1195 = vmatpush1.bf16.xpose.msra.mxu0 0
    %1196 = vmatprep.subr.bf16.mxu0 0
    %1197 = vmatpush1.bf16.xpose.msra.mxu0 0
    %1198 = vmatprep.subr.bf16.mxu0 0
    %1199 = vmatpush1.bf16.xpose.msra.mxu0 0
    %1200 = vmatprep.subr.bf16.mxu0 0
    %1201 = vmatpush1.bf16.xpose.msra.mxu0 0
    %1202 = vmatprep.subr.bf16.mxu0 0
    %1203 = vmatpush1.bf16.xpose.msra.mxu0 0
    %1204 = vmatprep.subr.bf16.mxu0 0
    %1205 = vmatpush1.bf16.xpose.msra.mxu0 0
    %1206 = vmatprep.subr.bf16.mxu0 0
    %1207 = vmatpush1.bf16.xpose.msra.mxu0 0
    %1208 = vmatprep.mubr.bf16.mxu0 0
    %1209 = vmatmul.mubr.bf16.gmra.mrb[0].mxu0 %v1171
    %v1210 = vpop.f32.mrb[0].mxu0
    %v1211 = vadd.f32 0.0, %v1210
    %v1212 = vpop.f32.mrb[0].mxu0
    %v1213 = vpop.f32.mrb[0].mxu0
    %v1214 = vpop.f32.mrb[0].mxu0
    %1215 = vdwg.mxu0
    %v1216 = vmul.f32 %v1211, 0.25
    %v1217 = vadd.f32 %v1216, %v323
    %v1218 = vsel %vm377, %v1061, -inf
    %1219 = vmax.xlane.f32.xlu0 %v1218
    %v1220 = vpop.xlane.xlu0 %1219
    %v1221 = vsel %vm377, %v1113, -inf
    %1222 = vmax.xlane.f32.xlu0 %v1221
    %v1223 = vpop.xlane.xlu0 %1222
    %v1224 = vsel %vm377, %v1165, -inf
    %1225 = vmax.xlane.f32.xlu0 %v1224
    %v1226 = vpop.xlane.xlu0 %1225
    %v1227 = vsel %vm377, %v1217, -inf
    %1228 = vmax.xlane.f32.xlu0 %v1227
    %v1229 = vpop.xlane.xlu0 %1228
    %v1230 = vsub.f32 %v1061, %v1220
    %v1231 = vsub.f32 %v1113, %v1223
    %v1232 = vsub.f32 %v1165, %v1226
    %v1233 = vsub.f32 %v1217, %v1229
    %v1234 = vmul.f32 %v1230, 1.442695
    %v1235 = vpow.pop %v1234
    %v1236 = vmul.f32 %v1231, 1.442695
    %v1237 = vpow.pop %v1236
    %v1238 = vmul.f32 %v1232, 1.442695
    %v1239 = vpow.pop %v1238
    %v1240 = vmul.f32 %v1233, 1.442695
    %v1241 = vpow.pop %v1240
    %v1242 = vsel %vm377, %v1235, 0.0
    %1243 = vadd.xlane.f32.xlu0 %v1242
    %v1244 = vpop.xlane.xlu0 %1243
    %v1245 = vsel %vm377, %v1237, 0.0
    %1246 = vadd.xlane.f32.xlu0 %v1245
    %v1247 = vpop.xlane.xlu0 %1246
    %v1248 = vsel %vm377, %v1239, 0.0
    %1249 = vadd.xlane.f32.xlu0 %v1248
    %v1250 = vpop.xlane.xlu0 %1249
    %v1251 = vsel %vm377, %v1241, 0.0
    %1252 = vadd.xlane.f32.xlu0 %v1251
    %v1253 = vpop.xlane.xlu0 %1252
    %v1254 = vrcp.pop %v1244
    %v1255 = vrcp.pop %v1247
    %v1256 = vrcp.pop %v1250
    %v1257 = vrcp.pop %v1253
    %v1258 = vmul.f32 %v1235, %v1254
    %v1259 = vmul.f32 %v1237, %v1255
    %v1260 = vmul.f32 %v1239, %v1256
    %v1261 = vmul.f32 %v1241, %v1257
    %v1262 = vpack.c.bf16 %v1258, %v1258
    %1263 = vrot.lane.b32.xlu0 %v1010, 64
    %v1264 = vpop.permute.xlu0 %1263
    %v1266 = vsel %vm377, %v1262, 0
    %v1269 = vsel %vm428, %v1264, 0
    %1271 = vmatprep.subr.bf16.mxu0 0
    %1272 = vmatpush1.bf16.msra.mxu0 %v1269
    %1273 = vmatprep.subr.bf16.mxu0 0
    %1274 = vmatpush1.bf16.msra.mxu0 0
    %1275 = vmatprep.subr.bf16.mxu0 0
    %1276 = vmatpush1.bf16.msra.mxu0 0
    %1277 = vmatprep.subr.bf16.mxu0 0
    %1278 = vmatpush1.bf16.msra.mxu0 0
    %1279 = vmatprep.subr.bf16.mxu0 0
    %1280 = vmatpush1.bf16.msra.mxu0 0
    %1281 = vmatprep.subr.bf16.mxu0 0
    %1282 = vmatpush1.bf16.msra.mxu0 0
    %1283 = vmatprep.subr.bf16.mxu0 0
    %1284 = vmatpush1.bf16.msra.mxu0 0
    %1285 = vmatprep.subr.bf16.mxu0 0
    %1286 = vmatpush1.bf16.msra.mxu0 0
    %1287 = vmatprep.subr.bf16.mxu0 0
    %1288 = vmatpush1.bf16.msra.mxu0 0
    %1289 = vmatprep.subr.bf16.mxu0 0
    %1290 = vmatpush1.bf16.msra.mxu0 0
    %1291 = vmatprep.subr.bf16.mxu0 0
    %1292 = vmatpush1.bf16.msra.mxu0 0
    %1293 = vmatprep.subr.bf16.mxu0 0
    %1294 = vmatpush1.bf16.msra.mxu0 0
    %1295 = vmatprep.subr.bf16.mxu0 0
    %1296 = vmatpush1.bf16.msra.mxu0 0
    %1297 = vmatprep.subr.bf16.mxu0 0
    %1298 = vmatpush1.bf16.msra.mxu0 0
    %1299 = vmatprep.subr.bf16.mxu0 0
    %1300 = vmatpush1.bf16.msra.mxu0 0
    %1301 = vmatprep.subr.bf16.mxu0 0
    %1302 = vmatpush1.bf16.msra.mxu0 0
    %1303 = vmatprep.mubr.bf16.mxu0 0
    %1304 = vmatmul.mubr.bf16.gmra.mrb[0].mxu0 %v1266
    %v1305 = vpop.f32.mrb[0].mxu0
    %v1306 = vadd.f32 0.0, %v1305
    %v1307 = vpop.f32.mrb[0].mxu0
    %v1308 = vpop.f32.mrb[0].mxu0
    %v1309 = vpop.f32.mrb[0].mxu0
    %1310 = vdwg.mxu0
    %v1311 = vpack.c.bf16 %v1259, %v1259
    %1312 = vrot.lane.b32.xlu0 %v1010, 48
    %v1313 = vpop.permute.xlu0 %1312
    %v1315 = vsel %vm377, %v1311, 0
    %v1318 = vsel %vm428, %v1313, 0
    %1320 = vmatprep.subr.bf16.mxu0 0
    %1321 = vmatpush1.bf16.msra.mxu0 %v1318
    %1322 = vmatprep.subr.bf16.mxu0 0
    %1323 = vmatpush1.bf16.msra.mxu0 0
    %1324 = vmatprep.subr.bf16.mxu0 0
    %1325 = vmatpush1.bf16.msra.mxu0 0
    %1326 = vmatprep.subr.bf16.mxu0 0
    %1327 = vmatpush1.bf16.msra.mxu0 0
    %1328 = vmatprep.subr.bf16.mxu0 0
    %1329 = vmatpush1.bf16.msra.mxu0 0
    %1330 = vmatprep.subr.bf16.mxu0 0
    %1331 = vmatpush1.bf16.msra.mxu0 0
    %1332 = vmatprep.subr.bf16.mxu0 0
    %1333 = vmatpush1.bf16.msra.mxu0 0
    %1334 = vmatprep.subr.bf16.mxu0 0
    %1335 = vmatpush1.bf16.msra.mxu0 0
    %1336 = vmatprep.subr.bf16.mxu0 0
    %1337 = vmatpush1.bf16.msra.mxu0 0
    %1338 = vmatprep.subr.bf16.mxu0 0
    %1339 = vmatpush1.bf16.msra.mxu0 0
    %1340 = vmatprep.subr.bf16.mxu0 0
    %1341 = vmatpush1.bf16.msra.mxu0 0
    %1342 = vmatprep.subr.bf16.mxu0 0
    %1343 = vmatpush1.bf16.msra.mxu0 0
    %1344 = vmatprep.subr.bf16.mxu0 0
    %1345 = vmatpush1.bf16.msra.mxu0 0
    %1346 = vmatprep.subr.bf16.mxu0 0
    %1347 = vmatpush1.bf16.msra.mxu0 0
    %1348 = vmatprep.subr.bf16.mxu0 0
    %1349 = vmatpush1.bf16.msra.mxu0 0
    %1350 = vmatprep.subr.bf16.mxu0 0
    %1351 = vmatpush1.bf16.msra.mxu0 0
    %1352 = vmatprep.mubr.bf16.mxu0 0
    %1353 = vmatmul.mubr.bf16.gmra.mrb[0].mxu0 %v1315
    %v1354 = vpop.f32.mrb[0].mxu0
    %v1355 = vadd.f32 0.0, %v1354
    %v1356 = vpop.f32.mrb[0].mxu0
    %v1357 = vpop.f32.mrb[0].mxu0
    %v1358 = vpop.f32.mrb[0].mxu0
    %1359 = vdwg.mxu0
    %1361 = vrot.lane.b32.xlu0 %v1355, 16
    %v1362 = vpop.permute.xlu0 %1361
    %v1364 = vsel %vm164, %v1306, %v1362
    %v1365 = vpack.c.bf16 %v1260, %v1260
    %1366 = vrot.lane.b32.xlu0 %v1114, 64
    %v1367 = vpop.permute.xlu0 %1366
    %v1369 = vsel %vm377, %v1365, 0
    %v1372 = vsel %vm428, %v1367, 0
    %1374 = vmatprep.subr.bf16.mxu0 0
    %1375 = vmatpush1.bf16.msra.mxu0 %v1372
    %1376 = vmatprep.subr.bf16.mxu0 0
    %1377 = vmatpush1.bf16.msra.mxu0 0
    %1378 = vmatprep.subr.bf16.mxu0 0
    %1379 = vmatpush1.bf16.msra.mxu0 0
    %1380 = vmatprep.subr.bf16.mxu0 0
    %1381 = vmatpush1.bf16.msra.mxu0 0
    %1382 = vmatprep.subr.bf16.mxu0 0
    %1383 = vmatpush1.bf16.msra.mxu0 0
    %1384 = vmatprep.subr.bf16.mxu0 0
    %1385 = vmatpush1.bf16.msra.mxu0 0
    %1386 = vmatprep.subr.bf16.mxu0 0
    %1387 = vmatpush1.bf16.msra.mxu0 0
    %1388 = vmatprep.subr.bf16.mxu0 0
    %1389 = vmatpush1.bf16.msra.mxu0 0
    %1390 = vmatprep.subr.bf16.mxu0 0
    %1391 = vmatpush1.bf16.msra.mxu0 0
    %1392 = vmatprep.subr.bf16.mxu0 0
    %1393 = vmatpush1.bf16.msra.mxu0 0
    %1394 = vmatprep.subr.bf16.mxu0 0
    %1395 = vmatpush1.bf16.msra.mxu0 0
    %1396 = vmatprep.subr.bf16.mxu0 0
    %1397 = vmatpush1.bf16.msra.mxu0 0
    %1398 = vmatprep.subr.bf16.mxu0 0
    %1399 = vmatpush1.bf16.msra.mxu0 0
    %1400 = vmatprep.subr.bf16.mxu0 0
    %1401 = vmatpush1.bf16.msra.mxu0 0
    %1402 = vmatprep.subr.bf16.mxu0 0
    %1403 = vmatpush1.bf16.msra.mxu0 0
    %1404 = vmatprep.subr.bf16.mxu0 0
    %1405 = vmatpush1.bf16.msra.mxu0 0
    %1406 = vmatprep.mubr.bf16.mxu0 0
    %1407 = vmatmul.mubr.bf16.gmra.mrb[0].mxu0 %v1369
    %v1408 = vpop.f32.mrb[0].mxu0
    %v1409 = vadd.f32 0.0, %v1408
    %v1410 = vpop.f32.mrb[0].mxu0
    %v1411 = vpop.f32.mrb[0].mxu0
    %v1412 = vpop.f32.mrb[0].mxu0
    %1413 = vdwg.mxu0
    %v1414 = vpack.c.bf16 %v1261, %v1261
    %1415 = vrot.lane.b32.xlu0 %v1114, 48
    %v1416 = vpop.permute.xlu0 %1415
    %v1418 = vsel %vm377, %v1414, 0
    %v1421 = vsel %vm428, %v1416, 0
    %1423 = vmatprep.subr.bf16.mxu0 0
    %1424 = vmatpush1.bf16.msra.mxu0 %v1421
    %1425 = vmatprep.subr.bf16.mxu0 0
    %1426 = vmatpush1.bf16.msra.mxu0 0
    %1427 = vmatprep.subr.bf16.mxu0 0
    %1428 = vmatpush1.bf16.msra.mxu0 0
    %1429 = vmatprep.subr.bf16.mxu0 0
    %1430 = vmatpush1.bf16.msra.mxu0 0
    %1431 = vmatprep.subr.bf16.mxu0 0
    %1432 = vmatpush1.bf16.msra.mxu0 0
    %1433 = vmatprep.subr.bf16.mxu0 0
    %1434 = vmatpush1.bf16.msra.mxu0 0
    %1435 = vmatprep.subr.bf16.mxu0 0
    %1436 = vmatpush1.bf16.msra.mxu0 0
    %1437 = vmatprep.subr.bf16.mxu0 0
    %1438 = vmatpush1.bf16.msra.mxu0 0
    %1439 = vmatprep.subr.bf16.mxu0 0
    %1440 = vmatpush1.bf16.msra.mxu0 0
    %1441 = vmatprep.subr.bf16.mxu0 0
    %1442 = vmatpush1.bf16.msra.mxu0 0
    %1443 = vmatprep.subr.bf16.mxu0 0
    %1444 = vmatpush1.bf16.msra.mxu0 0
    %1445 = vmatprep.subr.bf16.mxu0 0
    %1446 = vmatpush1.bf16.msra.mxu0 0
    %1447 = vmatprep.subr.bf16.mxu0 0
    %1448 = vmatpush1.bf16.msra.mxu0 0
    %1449 = vmatprep.subr.bf16.mxu0 0
    %1450 = vmatpush1.bf16.msra.mxu0 0
    %1451 = vmatprep.subr.bf16.mxu0 0
    %1452 = vmatpush1.bf16.msra.mxu0 0
    %1453 = vmatprep.subr.bf16.mxu0 0
    %1454 = vmatpush1.bf16.msra.mxu0 0
    %1455 = vmatprep.mubr.bf16.mxu0 0
    %1456 = vmatmul.mubr.bf16.gmra.mrb[0].mxu0 %v1418
    %v1457 = vpop.f32.mrb[0].mxu0
    %v1458 = vadd.f32 0.0, %v1457
    %v1459 = vpop.f32.mrb[0].mxu0
    %v1460 = vpop.f32.mrb[0].mxu0
    %v1461 = vpop.f32.mrb[0].mxu0
    %1462 = vdwg.mxu0
    %1464 = vrot.lane.b32.xlu0 %v1458, 16
    %v1465 = vpop.permute.xlu0 %1464
    %v1467 = vsel %vm164, %v1409, %v1465
    %v1468 = vpack.c.bf16 %v1467, %v1364
    %v1469 = vlaneseq
    %v1470 = vshrl.u32 %v1469, 7
    %v1471 = vsub.s32 2, %v1470
    %v1472 = vrot.slane %v948, %v1471
    %v1477 = vunpack.c.l.b16 %v929
    %v1478 = vunpack.c.l.b16 %v930
    %v1479 = vunpack.c.l.b16 %v931
    %v1480 = vunpack.c.l.b16 %v932
    %v1481 = vpack.c.b16 %v1478, %v1477
    %v1482 = vpack.c.b16 %v1480, %v1479
    %v1486 = vsel %vm38, %v1468, 0
    %1488 = vmatprep.subr.bf16.mxu0 0
    %1489 = vmatpush1.bf16.msra.mxu0 %v1481
    %1490 = vmatprep.subr.bf16.mxu0 0
    %1491 = vmatpush1.bf16.msra.mxu0 %v1482
    %1492 = vmatprep.subr.bf16.mxu0 0
    %1493 = vmatpush1.bf16.msra.mxu0 0
    %1494 = vmatprep.subr.bf16.mxu0 0
    %1495 = vmatpush1.bf16.msra.mxu0 0
    %1496 = vmatprep.subr.bf16.mxu0 0
    %1497 = vmatpush1.bf16.msra.mxu0 0
    %1498 = vmatprep.subr.bf16.mxu0 0
    %1499 = vmatpush1.bf16.msra.mxu0 0
    %1500 = vmatprep.subr.bf16.mxu0 0
    %1501 = vmatpush1.bf16.msra.mxu0 0
    %1502 = vmatprep.subr.bf16.mxu0 0
    %1503 = vmatpush1.bf16.msra.mxu0 0
    %1504 = vmatprep.subr.bf16.mxu0 0
    %1505 = vmatpush1.bf16.msra.mxu0 0
    %1506 = vmatprep.subr.bf16.mxu0 0
    %1507 = vmatpush1.bf16.msra.mxu0 0
    %1508 = vmatprep.subr.bf16.mxu0 0
    %1509 = vmatpush1.bf16.msra.mxu0 0
    %1510 = vmatprep.subr.bf16.mxu0 0
    %1511 = vmatpush1.bf16.msra.mxu0 0
    %1512 = vmatprep.subr.bf16.mxu0 0
    %1513 = vmatpush1.bf16.msra.mxu0 0
    %1514 = vmatprep.subr.bf16.mxu0 0
    %1515 = vmatpush1.bf16.msra.mxu0 0
    %1516 = vmatprep.subr.bf16.mxu0 0
    %1517 = vmatpush1.bf16.msra.mxu0 0
    %1518 = vmatprep.subr.bf16.mxu0 0
    %1519 = vmatpush1.bf16.msra.mxu0 0
    %1520 = vmatprep.mubr.bf16.mxu0 0
    %1521 = vmatmul.mubr.bf16.gmra.mrb[0].mxu0 %v1486
    %v1522 = vpop.f32.mrb[0].mxu0
    %v1523 = vadd.f32 %v1472, %v1522
    %v1524 = vpop.f32.mrb[0].mxu0
    %v1525 = vpop.f32.mrb[0].mxu0
    %v1526 = vadd.f32 %v1472, %v1525
    %v1527 = vpop.f32.mrb[0].mxu0
    %1528 = vdwg.mxu0
    %v1529 = vadd.f32 %v1523, %v921
    %v1530 = vadd.f32 %v1526, %v922
    %v1531 = vsel %vm38, %v1529, 0.0
    %1532 = vadd.xlane.f32.xlu0 %v1531
    %v1533 = vpop.xlane.xlu0 %1532
    %v1534 = vsel %vm38, %v1530, 0.0
    %1535 = vadd.xlane.f32.xlu0 %v1534
    %v1536 = vpop.xlane.xlu0 %1535
    %v1537 = vmul.f32 %v1533, %v45
    %v1538 = vmul.f32 %v1536, %v45
    %v1539 = vsub.f32 %v1529, %v1537
    %v1540 = vsub.f32 %v1530, %v1538
    %v1541 = vmul.f32 %v1539, %v1539
    %v1542 = vmul.f32 %v1540, %v1540
    %v1543 = vsel %vm38, %v1541, 0.0
    %1544 = vadd.xlane.f32.xlu0 %v1543
    %v1545 = vpop.xlane.xlu0 %1544
    %v1546 = vsel %vm38, %v1542, 0.0
    %1547 = vadd.xlane.f32.xlu0 %v1546
    %v1548 = vpop.xlane.xlu0 %1547
    %v1549 = vmul.f32 %v1545, %v45
    %v1550 = vmul.f32 %v1548, %v45
    %v1551 = vadd.f32 %v1549, 1e-12
    %v1552 = vadd.f32 %v1550, 1e-12
    %v1553 = vrsqrt.pop %v1551
    %v1554 = vrsqrt.pop %v1552
    %v1555 = vmul.f32 %v1539, %v1553
    %v1556 = vmul.f32 %v1540, %v1554
    %v1557 = vlaneseq
    %v1558 = vshrl.u32 %v1557, 7
    %v1559 = vsub.s32 4, %v1558
    %v1560 = vrot.slane %v948, %v1559
    %v1561 = vmul.f32 %v1555, %v1560
    %v1562 = vmul.f32 %v1556, %v1560
    %v1563 = vlaneseq
    %v1564 = vshrl.u32 %v1563, 7
    %v1565 = vsub.s32 5, %v1564
    %v1566 = vrot.slane %v948, %v1565
    %v1567 = vadd.f32 %v1561, %v1566
    %v1568 = vadd.f32 %v1562, %v1566
    %v1569 = vpack.c.bf16 %v1568, %v1567
    %v1570 = vlaneseq
    %v1571 = vshrl.u32 %v1570, 7
    %v1572 = vsub.s32 1, %v1571
    %v1573 = vrot.slane %v948, %v1572
    %v1578 = vunpack.c.l.b16 %v934
    %v1579 = vunpack.c.l.b16 %v935
    %v1580 = vunpack.c.l.b16 %v936
    %v1581 = vunpack.c.l.b16 %v937
    %v1582 = vpack.c.b16 %v1579, %v1578
    %v1583 = vpack.c.b16 %v1581, %v1580
    %v1587 = vsel %vm38, %v1569, 0
    %1589 = vmatprep.subr.bf16.mxu0 0
    %1590 = vmatpush1.bf16.msra.mxu0 %v1582
    %1591 = vmatprep.subr.bf16.mxu0 0
    %1592 = vmatpush1.bf16.msra.mxu0 %v1583
    %1593 = vmatprep.subr.bf16.mxu0 0
    %1594 = vmatpush1.bf16.msra.mxu0 0
    %1595 = vmatprep.subr.bf16.mxu0 0
    %1596 = vmatpush1.bf16.msra.mxu0 0
    %1597 = vmatprep.subr.bf16.mxu0 0
    %1598 = vmatpush1.bf16.msra.mxu0 0
    %1599 = vmatprep.subr.bf16.mxu0 0
    %1600 = vmatpush1.bf16.msra.mxu0 0
    %1601 = vmatprep.subr.bf16.mxu0 0
    %1602 = vmatpush1.bf16.msra.mxu0 0
    %1603 = vmatprep.subr.bf16.mxu0 0
    %1604 = vmatpush1.bf16.msra.mxu0 0
    %1605 = vmatprep.subr.bf16.mxu0 0
    %1606 = vmatpush1.bf16.msra.mxu0 0
    %1607 = vmatprep.subr.bf16.mxu0 0
    %1608 = vmatpush1.bf16.msra.mxu0 0
    %1609 = vmatprep.subr.bf16.mxu0 0
    %1610 = vmatpush1.bf16.msra.mxu0 0
    %1611 = vmatprep.subr.bf16.mxu0 0
    %1612 = vmatpush1.bf16.msra.mxu0 0
    %1613 = vmatprep.subr.bf16.mxu0 0
    %1614 = vmatpush1.bf16.msra.mxu0 0
    %1615 = vmatprep.subr.bf16.mxu0 0
    %1616 = vmatpush1.bf16.msra.mxu0 0
    %1617 = vmatprep.subr.bf16.mxu0 0
    %1618 = vmatpush1.bf16.msra.mxu0 0
    %1619 = vmatprep.subr.bf16.mxu0 0
    %1620 = vmatpush1.bf16.msra.mxu0 0
    %1621 = vmatprep.mubr.bf16.mxu0 0
    %1622 = vmatmul.mubr.bf16.gmra.mrb[0].mxu0 %v1587
    %v1623 = vpop.f32.mrb[0].mxu0
    %v1624 = vadd.f32 %v1573, %v1623
    %v1625 = vpop.f32.mrb[0].mxu0
    %v1626 = vpop.f32.mrb[0].mxu0
    %v1627 = vadd.f32 %v1573, %v1626
    %v1628 = vpop.f32.mrb[0].mxu0
    %1629 = vdwg.mxu0
    %v1630 = vmul.f32 %v1624, %v1624
    %v1631 = vmul.f32 %v1627, %v1627
    %v1632 = vmul.f32 %v1624, %v1630
    %v1633 = vmul.f32 %v1627, %v1631
    %v1634 = vmul.f32 %v1632, 0.044715
    %v1635 = vmul.f32 %v1633, 0.044715
    %v1636 = vadd.f32 %v1624, %v1634
    %v1637 = vadd.f32 %v1627, %v1635
    %v1638 = vmul.f32 %v1636, 0.7978846
    %v1639 = vmul.f32 %v1637, 0.7978846
    %v1640 = vtanh.pop %v1638
    %v1641 = vtanh.pop %v1639
    %v1642 = vadd.f32 %v1640, 1.0
    %v1643 = vadd.f32 %v1641, 1.0
    %v1644 = vmul.f32 %v1642, 0.5
    %v1645 = vmul.f32 %v1643, 0.5
    %v1646 = vmul.f32 %v1624, %v1644
    %v1647 = vmul.f32 %v1627, %v1645
    %v1648 = vpack.c.bf16 %v1647, %v1646
    %v1649 = vlaneseq
    %v1650 = vshrl.u32 %v1649, 7
    %v1651 = vsub.s32 3, %v1650
    %v1652 = vrot.slane %v948, %v1651
    %v1661 = vunpack.c.l.b16 %v939
    %v1662 = vunpack.c.l.b16 %v940
    %v1663 = vunpack.c.l.b16 %v941
    %v1664 = vunpack.c.l.b16 %v942
    %v1665 = vunpack.c.l.b16 %v943
    %v1666 = vunpack.c.l.b16 %v944
    %v1667 = vunpack.c.l.b16 %v945
    %v1668 = vunpack.c.l.b16 %v946
    %v1669 = vpack.c.b16 %v1662, %v1661
    %v1670 = vpack.c.b16 %v1664, %v1663
    %v1671 = vpack.c.b16 %v1666, %v1665
    %v1672 = vpack.c.b16 %v1668, %v1667
    %v1678 = vsel %vm838, %v1648, 0
    %1680 = vmatprep.subr.bf16.mxu0 0
    %1681 = vmatpush1.bf16.msra.mxu0 %v1669
    %1682 = vmatprep.subr.bf16.mxu0 0
    %1683 = vmatpush1.bf16.msra.mxu0 %v1670
    %1684 = vmatprep.subr.bf16.mxu0 0
    %1685 = vmatpush1.bf16.msra.mxu0 %v1671
    %1686 = vmatprep.subr.bf16.mxu0 0
    %1687 = vmatpush1.bf16.msra.mxu0 %v1672
    %1688 = vmatprep.subr.bf16.mxu0 0
    %1689 = vmatpush1.bf16.msra.mxu0 0
    %1690 = vmatprep.subr.bf16.mxu0 0
    %1691 = vmatpush1.bf16.msra.mxu0 0
    %1692 = vmatprep.subr.bf16.mxu0 0
    %1693 = vmatpush1.bf16.msra.mxu0 0
    %1694 = vmatprep.subr.bf16.mxu0 0
    %1695 = vmatpush1.bf16.msra.mxu0 0
    %1696 = vmatprep.subr.bf16.mxu0 0
    %1697 = vmatpush1.bf16.msra.mxu0 0
    %1698 = vmatprep.subr.bf16.mxu0 0
    %1699 = vmatpush1.bf16.msra.mxu0 0
    %1700 = vmatprep.subr.bf16.mxu0 0
    %1701 = vmatpush1.bf16.msra.mxu0 0
    %1702 = vmatprep.subr.bf16.mxu0 0
    %1703 = vmatpush1.bf16.msra.mxu0 0
    %1704 = vmatprep.subr.bf16.mxu0 0
    %1705 = vmatpush1.bf16.msra.mxu0 0
    %1706 = vmatprep.subr.bf16.mxu0 0
    %1707 = vmatpush1.bf16.msra.mxu0 0
    %1708 = vmatprep.subr.bf16.mxu0 0
    %1709 = vmatpush1.bf16.msra.mxu0 0
    %1710 = vmatprep.subr.bf16.mxu0 0
    %1711 = vmatpush1.bf16.msra.mxu0 0
    %1712 = vmatprep.mubr.bf16.mxu0 0
    %1713 = vmatmul.mubr.bf16.gmra.mrb[0].mxu0 %v1678
    %v1714 = vpop.f32.mrb[0].mxu0
    %v1715 = vadd.f32 %v1652, %v1714
    %v1716 = vpop.f32.mrb[0].mxu0
    %v1717 = vpop.f32.mrb[0].mxu0
    %v1718 = vadd.f32 %v1652, %v1717
    %v1719 = vpop.f32.mrb[0].mxu0
    %1720 = vdwg.mxu0
    %v1721 = vadd.f32 %v1715, %v1567
    %v1722 = vadd.f32 %v1718, %v1568
    %v1723 = vsel %vm38, %v1721, 0.0
    %1724 = vadd.xlane.f32.xlu0 %v1723
    %v1725 = vpop.xlane.xlu0 %1724
    %v1726 = vsel %vm38, %v1722, 0.0
    %1727 = vadd.xlane.f32.xlu0 %v1726
    %v1728 = vpop.xlane.xlu0 %1727
    %v1729 = vmul.f32 %v1725, %v45
    %v1730 = vmul.f32 %v1728, %v45
    %v1731 = vsub.f32 %v1721, %v1729
    %v1732 = vsub.f32 %v1722, %v1730
    %v1733 = vmul.f32 %v1731, %v1731
    %v1734 = vmul.f32 %v1732, %v1732
    %v1735 = vsel %vm38, %v1733, 0.0
    %1736 = vadd.xlane.f32.xlu0 %v1735
    %v1737 = vpop.xlane.xlu0 %1736
    %v1738 = vsel %vm38, %v1734, 0.0
    %1739 = vadd.xlane.f32.xlu0 %v1738
    %v1740 = vpop.xlane.xlu0 %1739
    %v1741 = vmul.f32 %v1737, %v45
    %v1742 = vmul.f32 %v1740, %v45
    %v1743 = vadd.f32 %v1741, 1e-12
    %v1744 = vadd.f32 %v1742, 1e-12
    %v1745 = vrsqrt.pop %v1743
    %v1746 = vrsqrt.pop %v1744
    %v1747 = vmul.f32 %v1731, %v1745
    %v1748 = vmul.f32 %v1732, %v1746
    %v1749 = vlaneseq
    %v1750 = vshrl.u32 %v1749, 7
    %v1751 = vsub.s32 6, %v1750
    %v1752 = vrot.slane %v948, %v1751
    %v1753 = vmul.f32 %v1747, %v1752
    %v1754 = vmul.f32 %v1748, %v1752
    %v1755 = vlaneseq
    %v1756 = vshrl.u32 %v1755, 7
    %v1757 = vsub.s32 7, %v1756
    %v1758 = vrot.slane %v948, %v1757
    %v1759 = vadd.f32 %v1753, %v1758
    %v1760 = vadd.f32 %v1754, %v1758
    %v1761 = vpack.c.bf16 %v1759, %v1759
    %v1762 = vpack.c.bf16 %v1760, %v1760
    %v1763 = vld [vmem:[%s8] sm:$0xf]
    %v1764 = vld [vmem:[%s8 + $0x4] sm:$0xf]
    %v1765 = vld [vmem:[%s8 + $0x8] sm:$0xf]
    %v1766 = vld [vmem:[%s8 + $0xc] sm:$0xf]
    %v1767 = vlaneseq
    %v1768 = vshrl.u32 %v1767, 7
    %v1769 = vsub.s32 2, %v1768
    %v1770 = vrot.slane %v37, %v1769
    %v1773 = vunpack.c.l.b16 %v1761
    %v1774 = vunpack.c.l.b16 %v1762
    %v1775 = vrot.slane %v1774, 7
    %vm1776 = vcmask 1041409
    %v1777 = vsel %vm1776, %v1775, %v1773
    %v1778 = vpack.c.b16 %v1777, %v1777
    %v1783 = vunpack.c.l.b16 %v1763
    %v1784 = vunpack.c.l.b16 %v1764
    %v1785 = vunpack.c.l.b16 %v1765
    %v1786 = vunpack.c.l.b16 %v1766
    %v1787 = vpack.c.b16 %v1784, %v1783
    %v1788 = vpack.c.b16 %v1786, %v1785
    %v1792 = vsel %vm38, %v1778, 0
    %1794 = vmatprep.subr.bf16.mxu0 0
    %1795 = vmatpush1.bf16.msra.mxu0 %v1787
    %1796 = vmatprep.subr.bf16.mxu0 0
    %1797 = vmatpush1.bf16.msra.mxu0 %v1788
    %1798 = vmatprep.subr.bf16.mxu0 0
    %1799 = vmatpush1.bf16.msra.mxu0 0
    %1800 = vmatprep.subr.bf16.mxu0 0
    %1801 = vmatpush1.bf16.msra.mxu0 0
    %1802 = vmatprep.subr.bf16.mxu0 0
    %1803 = vmatpush1.bf16.msra.mxu0 0
    %1804 = vmatprep.subr.bf16.mxu0 0
    %1805 = vmatpush1.bf16.msra.mxu0 0
    %1806 = vmatprep.subr.bf16.mxu0 0
    %1807 = vmatpush1.bf16.msra.mxu0 0
    %1808 = vmatprep.subr.bf16.mxu0 0
    %1809 = vmatpush1.bf16.msra.mxu0 0
    %1810 = vmatprep.subr.bf16.mxu0 0
    %1811 = vmatpush1.bf16.msra.mxu0 0
    %1812 = vmatprep.subr.bf16.mxu0 0
    %1813 = vmatpush1.bf16.msra.mxu0 0
    %1814 = vmatprep.subr.bf16.mxu0 0
    %1815 = vmatpush1.bf16.msra.mxu0 0
    %1816 = vmatprep.subr.bf16.mxu0 0
    %1817 = vmatpush1.bf16.msra.mxu0 0
    %1818 = vmatprep.subr.bf16.mxu0 0
    %1819 = vmatpush1.bf16.msra.mxu0 0
    %1820 = vmatprep.subr.bf16.mxu0 0
    %1821 = vmatpush1.bf16.msra.mxu0 0
    %1822 = vmatprep.subr.bf16.mxu0 0
    %1823 = vmatpush1.bf16.msra.mxu0 0
    %1824 = vmatprep.subr.bf16.mxu0 0
    %1825 = vmatpush1.bf16.msra.mxu0 0
    %1826 = vmatprep.mubr.bf16.mxu0 0
    %1827 = vmatmul.mubr.bf16.gmra.mrb[0].mxu0 %v1792
    %v1828 = vpop.f32.mrb[0].mxu0
    %v1829 = vadd.f32 %v1770, %v1828
    %v1830 = vpop.f32.mrb[0].mxu0
    %v1831 = vpop.f32.mrb[0].mxu0
    %v1832 = vpop.f32.mrb[0].mxu0
    %1833 = vdwg.mxu0
    %v1834 = vtanh.pop %v1829
    %vm1835 = vcmask 254976
    %1836 = vst.msk [vmem:[#allocation2] sm:$0x3] %vm1835, %v1834
    // Predicated region
    $region38: #{bert_forward.1} parent=1 // pred_check
      _
    $region39: #{bert_forward.1} parent=1 // pred_check_branch
      %1838 = sbr.rel (0) target = $region41
    $region40: #{bert_forward.1} parent=1 // pred_region
      %s1840 = ssub.s32 32, 32
      %1841 = vsyncadd [#allocation3], %s1840
      %s1843 = sshll.u32 [#allocation2], 4
      %s1844 = int_to_ptr.vmem [resolvable:$true] %s1843
      %1846 = dma.vmem_to_hbm [thread:$0]  %s1844, 32, %s9, [#allocation3]
    $region41: #{bert_forward.1} parent=1 // pred_fallthru
      _
    // Predicated region
    $region42: #{bert_forward.1} parent=1 // pred_check
      _
    $region43: #{bert_forward.1} parent=1 // pred_check_branch
      %1848 = sbr.rel (0) target = $region45
    $region44: #{bert_forward.1} parent=1 // pred_region
      %1849 = dma.done [#allocation3], 32
    $region45: #{bert_forward.1} parent=1 // pred_fallthru
      _
    %1850 = vsyncpa [#allocation3], 1

</llo_original>
